<compile_context>
chip_gen: v7x
topology: tpu7x:2x2x1
jax: 0.10.0
libtpu: 0.0.40
codegen_flags: <defaults>
</compile_context>

<pallas_src>
import functools

import jax
import jax.numpy as jnp
from jax.experimental import pallas as pl
from jax.experimental.pallas import tpu as pltpu


# --------------------------------------------------------------------------
# Kernels
# --------------------------------------------------------------------------
def conv1_fused_kernel(a_ref, x_ref, w1_ref, b1_ref, w2_ref, z2_ref, acc_ref,
                       *, tk):
    """Z2 = relu(A_hat @ (X @ W1) + b1) @ W2, tiled over (row-block i, k).

    X is VMEM-resident; its k-tile's feature transform is recomputed on the
    fly (cheap) so no (N, 128) Z1 intermediate ever touches HBM.
    """
    k = pl.program_id(1)

    @pl.when(k == 0)
    def _():
        acc_ref[...] = jnp.zeros_like(acc_ref)

    row = pl.multiple_of(k * tk, 128)
    z1_k = jnp.dot(
        x_ref[pl.ds(row, tk), :], w1_ref[...],
        preferred_element_type=jnp.float32,
    ).astype(jnp.bfloat16)
    acc_ref[...] += jnp.dot(
        a_ref[...], z1_k, preferred_element_type=jnp.float32
    )

    @pl.when(k == pl.num_programs(1) - 1)
    def _():
        h = jnp.maximum(acc_ref[...] + b1_ref[...], 0.0)
        # F.dropout(p=0.5): identity in eval mode.
        z2_ref[...] = jnp.dot(
            h.astype(jnp.bfloat16), w2_ref[...],
            preferred_element_type=jnp.float32,
        ).astype(z2_ref.dtype)


def conv2_head_kernel(a_ref, z_ref, b2_ref, w3_ref, b3_ref, out_ref, acc_ref,
                      *, tk, num_classes):
    """OUT = softmax(relu(A_hat @ Z2 + b2) @ W3 + b3) over the real classes.

    Z2 is VMEM-resident (constant block index => single DMA); k-tiles are
    sliced in-kernel, so only the A_hat tiles stream from HBM.
    """
    k = pl.program_id(1)

    @pl.when(k == 0)
    def _():
        acc_ref[...] = jnp.zeros_like(acc_ref)

    row = pl.multiple_of(k * tk, 128)
    acc_ref[...] += jnp.dot(
        a_ref[...], z_ref[pl.ds(row, tk), :],
        preferred_element_type=jnp.float32,
    )

    @pl.when(k == pl.num_programs(1) - 1)
    def _():
        h = jnp.maximum(acc_ref[...] + b2_ref[...], 0.0)
        # F.dropout(p=0.5): identity in eval mode.
        logits = jnp.dot(
            h.astype(jnp.bfloat16), w3_ref[...],
            preferred_element_type=jnp.float32,
        ) + b3_ref[...]
        # Mask the zero-padded class lanes so they get 0 probability.
        col = jax.lax.broadcasted_iota(jnp.int32, logits.shape, 1)
        logits = jnp.where(col < num_classes, logits, -1e30)
        m = jnp.max(logits, axis=1, keepdims=True)
        e = jnp.exp(logits - m)
        s = jnp.sum(e, axis=1, keepdims=True)
        out_ref[...] = e / s   # exact divide: runs once per row block, costs nothing


# --------------------------------------------------------------------------
# Glue
# --------------------------------------------------------------------------
def _round_up(x, m):
    return ((x + m - 1) // m) * m


def _pad2d(a, rows, cols, dtype):
    out = jnp.zeros((rows, cols), dtype)
    return out.at[: a.shape[0], : a.shape[1]].set(a.astype(dtype))


def _vmem_limit_bytes():
    """Generation-aware scoped-VMEM budget: ~75% of physical, capped at 100 MiB
    (=> ~48 MiB on v7x's 64 MiB, ~96 MiB on v5e/v6e's 128 MiB)."""
    try:
        cap = pltpu.get_tpu_info().vmem_capacity_bytes
    except Exception:  # pragma: no cover - conservative fallback
        cap = 64 * 1024 * 1024
    return min(int(cap) * 3 // 4, 100 * 1024 * 1024)


def _pick_tiles(n_pad):
    """(TM, TK) tiles for the padded (N, N) adjacency (n_pad % 128 == 0).

    TM grows to 512 (fills the 256-row MXU dim, amortizes ~0.35us/grid-step)
    while keeping >= 2 row blocks so the 'parallel' axis feeds both v7x TCs.
    TK grows to 2048 for HBM burst efficiency while keeping >= 2 k-steps of
    A-tile pipelining.  bf16 A tiles stay small (512x2048 = 2 MiB, 2-buffered).
    """
    tm = 128
    while tm < 512 and n_pad % (tm * 2) == 0 and n_pad // (tm * 2) >= 2:
        tm *= 2
    tk = 128
    while tk < 2048 and n_pad % (tk * 2) == 0 and n_pad // (tk * 2) >= 2:
        tk *= 2
    return tm, tk


def build_normalized_adjacency(edge_index, num_nodes):
    """Dense A_hat = D^{-1/2}(A + I)D^{-1/2}, PyG GCNConv semantics (f32).

    Note: duplicate edges accumulate (differs from coalesced PyG edge_index
    if duplicates are present).
    """
    src, dst = edge_index[0], edge_index[1]
    loops = jnp.arange(num_nodes, dtype=edge_index.dtype)
    src = jnp.concatenate([src, loops])
    dst = jnp.concatenate([dst, loops])
    deg = jnp.zeros((num_nodes,), jnp.float32).at[dst].add(1.0)
    dinv = jnp.where(deg > 0, jax.lax.rsqrt(deg), 0.0)
    norm = dinv[src] * dinv[dst]
    return jnp.zeros((num_nodes, num_nodes), jnp.float32).at[dst, src].add(norm)


def precompute_adjacency(edge_index, num_nodes):
    """One-time static-graph preprocessing (keep OUTSIDE the jitted forward):
    densify + normalize, zero-pad N up to a multiple of 128 (>= 256 so the
    parallel row axis has >= 2 blocks), and cast to bf16 — halving the
    dominant O(N^2) HBM operand."""
    n_pad = max(_round_up(num_nodes, 128), 256)
    a = build_normalized_adjacency(edge_index, num_nodes)
    return _pad2d(a, n_pad, n_pad, jnp.bfloat16)


def gcn_forward(x, a_hat_bf16, params):
    """Forward pass. `a_hat_bf16` is the (padded, bf16) output of
    precompute_adjacency — build it once per graph, not per call."""
    n, f = x.shape
    n_pad = a_hat_bf16.shape[0]
    h = params["w1"].shape[1]
    c = params["w3"].shape[1]
    hp = _round_up(h, 128)   # lane-dense hidden dim
    cp = _round_up(c, 128)   # lane-dense class dim

    tm, tk = _pick_tiles(n_pad)
    vmem = _vmem_limit_bytes()

    x_p = _pad2d(x, n_pad, f, jnp.float32)
    w1p = _pad2d(params["w1"], f, hp, jnp.float32)
    b1p = _pad2d(params["b1"], 1, hp, jnp.float32)
    w2p = _pad2d(params["w2"], hp, hp, jnp.bfloat16)
    b2p = _pad2d(params["b2"], 1, hp, jnp.float32)
    w3p = _pad2d(params["w3"], hp, cp, jnp.bfloat16)
    b3p = _pad2d(params["b3"], 1, cp, jnp.float32)

    # ---- stage 1: Z2 = relu(A_hat @ (X @ W1) + b1) @ W2 --------------------
    z2 = pl.pallas_call(
        functools.partial(conv1_fused_kernel, tk=tk),
        out_shape=jax.ShapeDtypeStruct((n_pad, hp), jnp.bfloat16),
        grid_spec=pltpu.PrefetchScalarGridSpec(
            num_scalar_prefetch=0,
            grid=(n_pad // tm, n_pad // tk),
            in_specs=[
                pl.BlockSpec((tm, tk), lambda i, k: (i, k)),      # A_hat tile (streamed)
                pl.BlockSpec((n_pad, f), lambda i, k: (0, 0)),    # X (resident, 1 DMA)
                pl.BlockSpec((f, hp), lambda i, k: (0, 0)),       # W1
                pl.BlockSpec((1, hp), lambda i, k: (0, 0)),       # b1
                pl.BlockSpec((hp, hp), lambda i, k: (0, 0)),      # W2
            ],
            out_specs=pl.BlockSpec((tm, hp), lambda i, k: (i, 0)),
            scratch_shapes=[pltpu.VMEM((tm, hp), jnp.float32)],
        ),
        compiler_params=pltpu.CompilerParams(
            dimension_semantics=("parallel", "arbitrary"),
            vmem_limit_bytes=vmem),
    )(a_hat_bf16, x_p, w1p, b1p, w2p)

    # ---- stage 2: OUT = softmax(relu(A_hat @ Z2 + b2) @ W3 + b3) -----------
    probs_padded = pl.pallas_call(
        functools.partial(conv2_head_kernel, tk=tk, num_classes=c),
        out_shape=jax.ShapeDtypeStruct((n_pad, cp), jnp.float32),
        grid_spec=pltpu.PrefetchScalarGridSpec(
            num_scalar_prefetch=0,
            grid=(n_pad // tm, n_pad // tk),
            in_specs=[
                pl.BlockSpec((tm, tk), lambda i, k: (i, k)),      # A_hat tile (streamed)
                pl.BlockSpec((n_pad, hp), lambda i, k: (0, 0)),   # Z2 (resident, 1 DMA)
                pl.BlockSpec((1, hp), lambda i, k: (0, 0)),       # b2
                pl.BlockSpec((hp, cp), lambda i, k: (0, 0)),      # W3
                pl.BlockSpec((1, cp), lambda i, k: (0, 0)),       # b3
            ],
            out_specs=pl.BlockSpec((tm, cp), lambda i, k: (i, 0)),
            scratch_shapes=[pltpu.VMEM((tm, hp), jnp.float32)],
        ),
        compiler_params=pltpu.CompilerParams(
            dimension_semantics=("parallel", "arbitrary"),
            vmem_limit_bytes=vmem),
    )(a_hat_bf16, z2, b2p, w3p, b3p)

    return probs_padded[:n, :c]


def reference_forward(x, edge_index, params):
    a_hat = build_normalized_adjacency(edge_index, x.shape[0])
    h = jnp.maximum(a_hat @ (x @ params["w1"]) + params["b1"], 0.0)
    h = jnp.maximum(a_hat @ (h @ params["w2"]) + params["b2"], 0.0)
    return jax.nn.softmax(h @ params["w3"] + params["b3"], axis=1)


if __name__ == "__main__":
    key = jax.random.PRNGKey(0)
    N, F, H, C = 256, 16, 32, 4        # nodes, num_features, hidden, num_classes
    kx, k1, k2, k3 = jax.random.split(key, 4)

    x = jax.random.normal(kx, (N, F), jnp.float32)

    # Deterministic small graph: undirected ring.
    i = jnp.arange(N, dtype=jnp.int32)
    src = jnp.concatenate([i, (i + 1) % N])
    dst = jnp.concatenate([(i + 1) % N, i])
    edge_index = jnp.stack([src, dst])                 # (2, 2N)

    def glorot(k, shape):
        lim = (6.0 / (shape[0] + shape[1])) ** 0.5
        return jax.random.uniform(k, shape, jnp.float32, -lim, lim)

    params = dict(
        w1=glorot(k1, (F, H)), b1=jnp.zeros((1, H), jnp.float32),
        w2=glorot(k2, (H, H)), b2=jnp.zeros((1, H), jnp.float32),
        w3=glorot(k3, (H, C)), b3=jnp.zeros((1, C), jnp.float32),
    )

    # Static-graph preprocessing: done ONCE, outside the jitted forward.
    a_hat_bf16 = jax.block_until_ready(precompute_adjacency(edge_index, N))

    out = jax.jit(gcn_forward)(x, a_hat_bf16, params)
    jax.block_until_ready(out)

    ref = reference_forward(x, edge_index, params)
    assert out.shape == (N, C)
    # bf16 adjacency / intermediates => modest tolerance.
    assert jnp.allclose(out, ref, atol=2e-2, rtol=2e-2)
    # Exact softmax divide => rows sum to 1 within f32 rounding.
    assert jnp.allclose(jnp.sum(out, axis=1), 1.0, atol=1e-4)

    print("KERNEL_OK")
</pallas_src>

<mosaic_0001>
module attributes {stable_mosaic.version = 11 : i64} {
  func.func @conv1_fused_kernel(%arg0: i32, %arg1: i32, %arg2: memref<128x128xbf16, #tpu.memory_space<vmem>>, %arg3: memref<256x16xf32, #tpu.memory_space<vmem>>, %arg4: memref<16x128xf32, #tpu.memory_space<vmem>>, %arg5: memref<1x128xf32, #tpu.memory_space<vmem>>, %arg6: memref<128x128xbf16, #tpu.memory_space<vmem>>, %arg7: memref<128x128xbf16, #tpu.memory_space<vmem>>, %arg8: memref<128x128xf32, #tpu.memory_space<vmem>>) attributes {dimension_semantics = [#tpu.dimension_semantics<parallel>, #tpu.dimension_semantics<arbitrary>], iteration_bounds = array<i64: 2, 2>, scalar_prefetch = 0 : i64, scratch_operands = 1 : i64, tpu.core_type = #tpu.core_type<tc>, window_params = [{transform_indices = @transform_0, window_bounds = array<i64: 128, 128>}, {pipeline_mode = #tpu.pipeline_mode<synchronous>, transform_indices = @transform_1, window_bounds = array<i64: 256, 16>}, {pipeline_mode = #tpu.pipeline_mode<synchronous>, transform_indices = @transform_2, window_bounds = array<i64: 16, 128>}, {pipeline_mode = #tpu.pipeline_mode<synchronous>, transform_indices = @transform_3, window_bounds = array<i64: 1, 128>}, {pipeline_mode = #tpu.pipeline_mode<synchronous>, transform_indices = @transform_4, window_bounds = array<i64: 128, 128>}, {transform_indices = @transform_5, window_bounds = array<i64: 128, 128>}]} {
    %c0_i32 = arith.constant 0 : i32
    %0 = arith.cmpi eq, %arg1, %c0_i32 : i32
    %1 = arith.extui %0 : i1 to i32
    %c0_i32_0 = arith.constant 0 : i32
    %2 = arith.cmpi ne, %1, %c0_i32_0 : i32
    scf.if %2 {
      %cst_11 = arith.constant 0.000000e+00 : f32
      %18 = vector.broadcast %cst_11 : f32 to vector<128x128xf32>
      %c0_12 = arith.constant 0 : index
      %c0_13 = arith.constant 0 : index
      %19 = vector.load %arg8[%c0_12, %c0_13] : memref<128x128xf32, #tpu.memory_space<vmem>>, vector<128x128xf32>
      tpu.vector_store %arg8[%c0_12, %c0_13], %18 {strides = array<i32>} : memref<128x128xf32, #tpu.memory_space<vmem>>, vector<128x128xf32>,
    } else {
    }
    %c128_i32 = arith.constant 128 : i32
    %3 = arith.muli %arg1, %c128_i32 : i32
    %4 = tpu.assume_multiple %3, 128 : i32
    %5 = arith.index_cast %4 : i32 to index
    %c0 = arith.constant 0 : index
    %6 = vector.load %arg3[%5, %c0] : memref<256x16xf32, #tpu.memory_space<vmem>>, vector<128x16xf32>
    %c0_1 = arith.constant 0 : index
    %c0_2 = arith.constant 0 : index
    %7 = vector.load %arg4[%c0_1, %c0_2] : memref<16x128xf32, #tpu.memory_space<vmem>>, vector<16x128xf32>
    %cst = arith.constant dense<0.000000e+00> : vector<128x128xf32>
    %8 = tpu.matmul %6, %7, %cst {dimension_numbers = #tpu.dot_dimension_numbers<[1], [0], [0], [1], [0, 0, 1, 1], [], []>} : vector<128x16xf32>, vector<16x128xf32>, vector<128x128xf32> -> vector<128x128xf32>
    %9 = arith.truncf %8 : vector<128x128xf32> to vector<128x128xbf16>
    %c0_3 = arith.constant 0 : index
    %c0_4 = arith.constant 0 : index
    %10 = vector.load %arg8[%c0_3, %c0_4] : memref<128x128xf32, #tpu.memory_space<vmem>>, vector<128x128xf32>
    %c0_5 = arith.constant 0 : index
    %c0_6 = arith.constant 0 : index
    %11 = vector.load %arg2[%c0_5, %c0_6] : memref<128x128xbf16, #tpu.memory_space<vmem>>, vector<128x128xbf16>
    %cst_7 = arith.constant dense<0.000000e+00> : vector<128x128xf32>
    %12 = tpu.matmul %11, %9, %cst_7 {dimension_numbers = #tpu.dot_dimension_numbers<[1], [0], [0], [1], [0, 0, 1, 1], [], []>} : vector<128x128xbf16>, vector<128x128xbf16>, vector<128x128xf32> -> vector<128x128xf32>
    %13 = arith.addf %10, %12 : vector<128x128xf32>
    %c0_8 = arith.constant 0 : index
    %c0_9 = arith.constant 0 : index
    %14 = vector.load %arg8[%c0_8, %c0_9] : memref<128x128xf32, #tpu.memory_space<vmem>>, vector<128x128xf32>
    tpu.vector_store %arg8[%c0_8, %c0_9], %13 {strides = array<i32>} : memref<128x128xf32, #tpu.memory_space<vmem>>, vector<128x128xf32>,
    %c1_i32 = arith.constant 1 : i32
    %15 = arith.cmpi eq, %arg1, %c1_i32 : i32
    %16 = arith.extui %15 : i1 to i32
    %c0_i32_10 = arith.constant 0 : i32
    %17 = arith.cmpi ne, %16, %c0_i32_10 : i32
    scf.if %17 {
      %c0_11 = arith.constant 0 : index
      %c0_12 = arith.constant 0 : index
      %18 = vector.load %arg8[%c0_11, %c0_12] : memref<128x128xf32, #tpu.memory_space<vmem>>, vector<128x128xf32>
      %c0_13 = arith.constant 0 : index
      %c0_14 = arith.constant 0 : index
      %19 = vector.load %arg5[%c0_13, %c0_14] : memref<1x128xf32, #tpu.memory_space<vmem>>, vector<1x128xf32>
      %20 = vector.broadcast %19 : vector<1x128xf32> to vector<128x128xf32>
      %21 = arith.addf %18, %20 : vector<128x128xf32>
      %cst_15 = arith.constant 0.000000e+00 : f32
      %22 = vector.broadcast %cst_15 : f32 to vector<128x128xf32>
      %23 = arith.maximumf %21, %22 : vector<128x128xf32>
      %24 = arith.truncf %23 : vector<128x128xf32> to vector<128x128xbf16>
      %c0_16 = arith.constant 0 : index
      %c0_17 = arith.constant 0 : index
      %25 = vector.load %arg6[%c0_16, %c0_17] : memref<128x128xbf16, #tpu.memory_space<vmem>>, vector<128x128xbf16>
      %cst_18 = arith.constant dense<0.000000e+00> : vector<128x128xf32>
      %26 = tpu.matmul %24, %25, %cst_18 {dimension_numbers = #tpu.dot_dimension_numbers<[1], [0], [0], [1], [0, 0, 1, 1], [], []>} : vector<128x128xbf16>, vector<128x128xbf16>, vector<128x128xf32> -> vector<128x128xf32>
      %27 = arith.truncf %26 : vector<128x128xf32> to vector<128x128xbf16>
      %c0_19 = arith.constant 0 : index
      %c0_20 = arith.constant 0 : index
      %28 = vector.load %arg7[%c0_19, %c0_20] : memref<128x128xbf16, #tpu.memory_space<vmem>>, vector<128x128xbf16>
      tpu.vector_store %arg7[%c0_19, %c0_20], %27 {strides = array<i32>} : memref<128x128xbf16, #tpu.memory_space<vmem>>, vector<128x128xbf16>,
    } else {
    }
    return
  }
  func.func @transform_0(%arg0: i32, %arg1: i32) -> (i32, i32) {
    %c0_i32 = arith.constant 0 : i32
    return %arg0, %arg1 : i32, i32
  }
  func.func @transform_1(%arg0: i32, %arg1: i32) -> (i32, i32) {
    %c0_i32 = arith.constant 0 : i32
    %c0_i32_0 = arith.constant 0 : i32
    %c0_i32_1 = arith.constant 0 : i32
    return %c0_i32, %c0_i32_0 : i32, i32
  }
  func.func @transform_2(%arg0: i32, %arg1: i32) -> (i32, i32) {
    %c0_i32 = arith.constant 0 : i32
    %c0_i32_0 = arith.constant 0 : i32
    %c0_i32_1 = arith.constant 0 : i32
    return %c0_i32, %c0_i32_0 : i32, i32
  }
  func.func @transform_3(%arg0: i32, %arg1: i32) -> (i32, i32) {
    %c0_i32 = arith.constant 0 : i32
    %c0_i32_0 = arith.constant 0 : i32
    %c0_i32_1 = arith.constant 0 : i32
    return %c0_i32, %c0_i32_0 : i32, i32
  }
  func.func @transform_4(%arg0: i32, %arg1: i32) -> (i32, i32) {
    %c0_i32 = arith.constant 0 : i32
    %c0_i32_0 = arith.constant 0 : i32
    %c0_i32_1 = arith.constant 0 : i32
    return %c0_i32, %c0_i32_0 : i32, i32
  }
  func.func @transform_5(%arg0: i32, %arg1: i32) -> (i32, i32) {
    %c0_i32 = arith.constant 0 : i32
    %c0_i32_0 = arith.constant 0 : i32
    return %arg0, %c0_i32 : i32, i32
  }
}

module attributes {stable_mosaic.version = 11 : i64} {
  func.func @conv2_head_kernel(%arg0: i32, %arg1: i32, %arg2: memref<128x128xbf16, #tpu.memory_space<vmem>>, %arg3: memref<256x128xbf16, #tpu.memory_space<vmem>>, %arg4: memref<1x128xf32, #tpu.memory_space<vmem>>, %arg5: memref<128x128xbf16, #tpu.memory_space<vmem>>, %arg6: memref<1x128xf32, #tpu.memory_space<vmem>>, %arg7: memref<128x128xf32, #tpu.memory_space<vmem>>, %arg8: memref<128x128xf32, #tpu.memory_space<vmem>>) attributes {dimension_semantics = [#tpu.dimension_semantics<parallel>, #tpu.dimension_semantics<arbitrary>], iteration_bounds = array<i64: 2, 2>, scalar_prefetch = 0 : i64, scratch_operands = 1 : i64, tpu.core_type = #tpu.core_type<tc>, window_params = [{transform_indices = @transform_0, window_bounds = array<i64: 128, 128>}, {pipeline_mode = #tpu.pipeline_mode<synchronous>, transform_indices = @transform_1, window_bounds = array<i64: 256, 128>}, {pipeline_mode = #tpu.pipeline_mode<synchronous>, transform_indices = @transform_2, window_bounds = array<i64: 1, 128>}, {pipeline_mode = #tpu.pipeline_mode<synchronous>, transform_indices = @transform_3, window_bounds = array<i64: 128, 128>}, {pipeline_mode = #tpu.pipeline_mode<synchronous>, transform_indices = @transform_4, window_bounds = array<i64: 1, 128>}, {transform_indices = @transform_5, window_bounds = array<i64: 128, 128>}]} {
    %c0_i32 = arith.constant 0 : i32
    %0 = arith.cmpi eq, %arg1, %c0_i32 : i32
    %1 = arith.extui %0 : i1 to i32
    %c0_i32_0 = arith.constant 0 : i32
    %2 = arith.cmpi ne, %1, %c0_i32_0 : i32
    scf.if %2 {
      %cst_8 = arith.constant 0.000000e+00 : f32
      %15 = vector.broadcast %cst_8 : f32 to vector<128x128xf32>
      %c0_9 = arith.constant 0 : index
      %c0_10 = arith.constant 0 : index
      %16 = vector.load %arg8[%c0_9, %c0_10] : memref<128x128xf32, #tpu.memory_space<vmem>>, vector<128x128xf32>
      tpu.vector_store %arg8[%c0_9, %c0_10], %15 {strides = array<i32>} : memref<128x128xf32, #tpu.memory_space<vmem>>, vector<128x128xf32>,
    } else {
    }
    %c128_i32 = arith.constant 128 : i32
    %3 = arith.muli %arg1, %c128_i32 : i32
    %4 = tpu.assume_multiple %3, 128 : i32
    %c0 = arith.constant 0 : index
    %c0_1 = arith.constant 0 : index
    %5 = vector.load %arg8[%c0, %c0_1] : memref<128x128xf32, #tpu.memory_space<vmem>>, vector<128x128xf32>
    %c0_2 = arith.constant 0 : index
    %c0_3 = arith.constant 0 : index
    %6 = vector.load %arg2[%c0_2, %c0_3] : memref<128x128xbf16, #tpu.memory_space<vmem>>, vector<128x128xbf16>
    %7 = arith.index_cast %4 : i32 to index
    %c0_4 = arith.constant 0 : index
    %8 = vector.load %arg3[%7, %c0_4] : memref<256x128xbf16, #tpu.memory_space<vmem>>, vector<128x128xbf16>
    %cst = arith.constant dense<0.000000e+00> : vector<128x128xf32>
    %9 = tpu.matmul %6, %8, %cst {dimension_numbers = #tpu.dot_dimension_numbers<[1], [0], [0], [1], [0, 0, 1, 1], [], []>} : vector<128x128xbf16>, vector<128x128xbf16>, vector<128x128xf32> -> vector<128x128xf32>
    %10 = arith.addf %5, %9 : vector<128x128xf32>
    %c0_5 = arith.constant 0 : index
    %c0_6 = arith.constant 0 : index
    %11 = vector.load %arg8[%c0_5, %c0_6] : memref<128x128xf32, #tpu.memory_space<vmem>>, vector<128x128xf32>
    tpu.vector_store %arg8[%c0_5, %c0_6], %10 {strides = array<i32>} : memref<128x128xf32, #tpu.memory_space<vmem>>, vector<128x128xf32>,
    %c1_i32 = arith.constant 1 : i32
    %12 = arith.cmpi eq, %arg1, %c1_i32 : i32
    %13 = arith.extui %12 : i1 to i32
    %c0_i32_7 = arith.constant 0 : i32
    %14 = arith.cmpi ne, %13, %c0_i32_7 : i32
    scf.if %14 {
      %c0_8 = arith.constant 0 : index
      %c0_9 = arith.constant 0 : index
      %15 = vector.load %arg8[%c0_8, %c0_9] : memref<128x128xf32, #tpu.memory_space<vmem>>, vector<128x128xf32>
      %c0_10 = arith.constant 0 : index
      %c0_11 = arith.constant 0 : index
      %16 = vector.load %arg4[%c0_10, %c0_11] : memref<1x128xf32, #tpu.memory_space<vmem>>, vector<1x128xf32>
      %17 = vector.broadcast %16 : vector<1x128xf32> to vector<128x128xf32>
      %18 = arith.addf %15, %17 : vector<128x128xf32>
      %cst_12 = arith.constant 0.000000e+00 : f32
      %19 = vector.broadcast %cst_12 : f32 to vector<128x128xf32>
      %20 = arith.maximumf %18, %19 : vector<128x128xf32>
      %21 = arith.truncf %20 : vector<128x128xf32> to vector<128x128xbf16>
      %c0_13 = arith.constant 0 : index
      %c0_14 = arith.constant 0 : index
      %22 = vector.load %arg5[%c0_13, %c0_14] : memref<128x128xbf16, #tpu.memory_space<vmem>>, vector<128x128xbf16>
      %cst_15 = arith.constant dense<0.000000e+00> : vector<128x128xf32>
      %23 = tpu.matmul %21, %22, %cst_15 {dimension_numbers = #tpu.dot_dimension_numbers<[1], [0], [0], [1], [0, 0, 1, 1], [], []>} : vector<128x128xbf16>, vector<128x128xbf16>, vector<128x128xf32> -> vector<128x128xf32>
      %c0_16 = arith.constant 0 : index
      %c0_17 = arith.constant 0 : index
      %24 = vector.load %arg6[%c0_16, %c0_17] : memref<1x128xf32, #tpu.memory_space<vmem>>, vector<1x128xf32>
      %25 = vector.broadcast %24 : vector<1x128xf32> to vector<128x128xf32>
      %26 = arith.addf %23, %25 : vector<128x128xf32>
      %27 = tpu.iota {dimensions = array<i32: 1>} : vector<128x128xi32>
      %c4_i32 = arith.constant 4 : i32
      %28 = vector.broadcast %c4_i32 : i32 to vector<128x128xi32>
      %29 = arith.cmpi slt, %27, %28 : vector<128x128xi32>
      %cst_18 = arith.constant -1.000000e+30 : f32
      %30 = vector.broadcast %cst_18 : f32 to vector<128x128xf32>
      %31 = arith.select %29, %26, %30 : vector<128x128xi1>, vector<128x128xf32>
      %cst_19 = arith.constant dense<0xFF800000> : vector<128xf32>
      %32 = vector.multi_reduction <maximumf>, %31, %cst_19 [1] : vector<128x128xf32> to vector<128xf32>
      %33 = vector.shape_cast %32 : vector<128xf32> to vector<128x1xf32>
      %34 = vector.broadcast %33 : vector<128x1xf32> to vector<128x128xf32>
      %35 = arith.subf %31, %34 : vector<128x128xf32>
      %36 = math.exp %35 : vector<128x128xf32>
      %cst_20 = arith.constant dense<0.000000e+00> : vector<128xf32>
      %37 = vector.multi_reduction <add>, %36, %cst_20 [1] : vector<128x128xf32> to vector<128xf32>
      %38 = vector.shape_cast %37 : vector<128xf32> to vector<128x1xf32>
      %39 = vector.broadcast %38 : vector<128x1xf32> to vector<128x128xf32>
      %40 = arith.divf %36, %39 : vector<128x128xf32>
      %c0_21 = arith.constant 0 : index
      %c0_22 = arith.constant 0 : index
      %41 = vector.load %arg7[%c0_21, %c0_22] : memref<128x128xf32, #tpu.memory_space<vmem>>, vector<128x128xf32>
      tpu.vector_store %arg7[%c0_21, %c0_22], %40 {strides = array<i32>} : memref<128x128xf32, #tpu.memory_space<vmem>>, vector<128x128xf32>,
    } else {
    }
    return
  }
  func.func @transform_0(%arg0: i32, %arg1: i32) -> (i32, i32) {
    %c0_i32 = arith.constant 0 : i32
    return %arg0, %arg1 : i32, i32
  }
  func.func @transform_1(%arg0: i32, %arg1: i32) -> (i32, i32) {
    %c0_i32 = arith.constant 0 : i32
    %c0_i32_0 = arith.constant 0 : i32
    %c0_i32_1 = arith.constant 0 : i32
    return %c0_i32, %c0_i32_0 : i32, i32
  }
  func.func @transform_2(%arg0: i32, %arg1: i32) -> (i32, i32) {
    %c0_i32 = arith.constant 0 : i32
    %c0_i32_0 = arith.constant 0 : i32
    %c0_i32_1 = arith.constant 0 : i32
    return %c0_i32, %c0_i32_0 : i32, i32
  }
  func.func @transform_3(%arg0: i32, %arg1: i32) -> (i32, i32) {
    %c0_i32 = arith.constant 0 : i32
    %c0_i32_0 = arith.constant 0 : i32
    %c0_i32_1 = arith.constant 0 : i32
    return %c0_i32, %c0_i32_0 : i32, i32
  }
  func.func @transform_4(%arg0: i32, %arg1: i32) -> (i32, i32) {
    %c0_i32 = arith.constant 0 : i32
    %c0_i32_0 = arith.constant 0 : i32
    %c0_i32_1 = arith.constant 0 : i32
    return %c0_i32, %c0_i32_0 : i32, i32
  }
  func.func @transform_5(%arg0: i32, %arg1: i32) -> (i32, i32) {
    %c0_i32 = arith.constant 0 : i32
    %c0_i32_0 = arith.constant 0 : i32
    return %arg0, %c0_i32 : i32, i32
  }
}

</mosaic_0001>

<llo_original>
// kernel: gcn_forward.3
$region0: #{gcn_forward.3}
  #allocation0 [shape = 'u32[]', space=smem, size = 0x4, offset = 0x4, fixed_abs, tag = 'smem constant byte address 0x4 - core index']
  #allocation1 [shape = 'u32[144,128]{1,0:T(1,128)}', space=vmem, size = 0x12000, scoped, tag = 'internal scratch']
  #allocation2 [shape = 'f32[128,128]{1,0:T(8,128)}', space=vmem, size = 0x10000, scoped, tag = 'scratch operand']
  %s0 = inlined_call_operand.vmem [shape: bf16[256,256], index: 0, kind: input, shape index: {}]
  %s1 = inlined_call_operand.vmem [shape: bf16[256,128], index: 1, kind: input, shape index: {}]
  %s2 = inlined_call_operand.vmem [shape: f32[1,128], index: 2, kind: input, shape index: {}]
  %s3 = inlined_call_operand.vmem [shape: bf16[128,128], index: 3, kind: input, shape index: {}]
  %s4 = inlined_call_operand.vmem [shape: f32[1,128], index: 4, kind: input, shape index: {}]
  %s5 = inlined_call_operand.vmem [shape: f32[256,128], index: 5, kind: output, shape index: {}]
  %s6 = sld [smem:[#allocation0]]
  $region102: #{gcn_forward.3} parent=0
    _
  %s8 = ssub.s32 1, %s6
  %s9 = scalar_select 0, %s8, %s6
  $region1: #{gcn_forward.3} parent=0
    #allocation3 [shape = 'u8[65536]{0}', space=vmem, size = 0x10000, scoped, tag = 'input window, operand 0']
    loop: start=0, step=1, limit=6
    $region2: #{gcn_forward.3} parent=1 // loop_pre_header
      _
    $region3: #{gcn_forward.3} parent=1 // loop_header
      %s11 = sphi 0, %s15
      %p12 = scmp.ge.s32.totalorder %s11, 6
      %s18 = sphi 0, %s30
      %s19 = sphi 0, %s26
      %s20 = sphi 0, %s18
      %s21 = sphi 0, %s19
      %s22 = sphi 0, %s20
      %s23 = sphi 0, %s21
      %s35 = sphi 0, %s37
      %s38 = sphi 0, %s35
      %s39 = sphi 0, %s38
      %s55 = sphi 0, %s39
      %s59 = sphi 0, %s59
      %s61 = sphi 0, %s59
      %s62 = sphi 0, %s61
      %s76 = sphi 0, %s62
      %s80 = sphi 0, %s80
      %s82 = sphi 0, %s80
      %s83 = sphi 0, %s82
      %s97 = sphi 0, %s83
      %s101 = sphi 0, %s101
      %s103 = sphi 0, %s101
      %s104 = sphi 0, %s103
      %s118 = sphi 0, %s104
      %s122 = sphi 0, %s122
      %s124 = sphi 0, %s122
      %s125 = sphi 0, %s124
      %s139 = sphi 0, %s125
      %s145 = sphi 0, %s147
      %s148 = sphi 0, %s145
      %s149 = sphi 0, %s148
      %s165 = sphi 0, %s149
    $region4: #{gcn_forward.3} parent=1 // loop_header_branch
      %14 = sbr.rel (%p12) target = $region8
    $region5: #{gcn_forward.3} parent=1 // loop_body
      %s16 = ssub.s32 %s11, 1
      %s17 = ssub.s32 %s11, 2
      %s24 = sadd.s32 1, %s19
      %p25 = scmp.ge.s32.totalorder %s24, 2
      %s26 = scalar_select %p25, 0, %s24
      %s27 = sadd.s32 1, %s18
      %s28 = scalar_select %p25, %s27, %s18
      %p29 = scmp.ge.s32.totalorder %s28, 2
      %s30 = scalar_select %p29, 0, %s28
      %s31 = ssub.s32 %s18, %s30
      %s32 = ssub.s32 %s19, %s26
      %s33 = sor.u32 %s31, %s32
      %p34 = scmp.eq.s32.totalorder %s33, 0
      %s36 = sadd.s32 %s35, 1
      %s37 = scalar_select %p34, %s35, %s36
      %p40 = pneg %p34
      %p41 = scmp.eq.s32.totalorder %s11, 3
      %p42 = por %p40, %p41
      %p43 = scmp.ne.s32.totalorder %s35, %s38
      %p44 = scmp.eq.s32.totalorder %s11, 0
      %p45 = por %p43, %p44
      %p46 = scmp.ne.s32.totalorder %s35, %s38
      %p47 = scmp.eq.s32.totalorder %s16, 3
      %p48 = por %p46, %p47
      %p49 = scmp.ne.s32.totalorder %s38, %s39
      %p50 = scmp.eq.s32.totalorder %s16, 0
      %p51 = por %p49, %p50
      %p52 = scmp.ne.s32.totalorder %s38, %s39
      %p53 = scmp.eq.s32.totalorder %s17, 3
      %p54 = por %p52, %p53
      %p56 = scmp.ne.s32.totalorder %s39, %s55
      %p57 = scmp.eq.s32.totalorder %s17, 0
      %p58 = por %p56, %p57
      %s60 = sadd.s32 %s59, 1
      %p63 = scmp.eq.s32.totalorder %s11, 3
      %p64 = scmp.ne.s32.totalorder %s59, %s61
      %p65 = scmp.eq.s32.totalorder %s11, 0
      %p66 = por %p64, %p65
      %p67 = scmp.ne.s32.totalorder %s59, %s61
      %p68 = scmp.eq.s32.totalorder %s16, 3
      %p69 = por %p67, %p68
      %p70 = scmp.ne.s32.totalorder %s61, %s62
      %p71 = scmp.eq.s32.totalorder %s16, 0
      %p72 = por %p70, %p71
      %p73 = scmp.ne.s32.totalorder %s61, %s62
      %p74 = scmp.eq.s32.totalorder %s17, 3
      %p75 = por %p73, %p74
      %p77 = scmp.ne.s32.totalorder %s62, %s76
      %p78 = scmp.eq.s32.totalorder %s17, 0
      %p79 = por %p77, %p78
      %s81 = sadd.s32 %s80, 1
      %p84 = scmp.eq.s32.totalorder %s11, 3
      %p85 = scmp.ne.s32.totalorder %s80, %s82
      %p86 = scmp.eq.s32.totalorder %s11, 0
      %p87 = por %p85, %p86
      %p88 = scmp.ne.s32.totalorder %s80, %s82
      %p89 = scmp.eq.s32.totalorder %s16, 3
      %p90 = por %p88, %p89
      %p91 = scmp.ne.s32.totalorder %s82, %s83
      %p92 = scmp.eq.s32.totalorder %s16, 0
      %p93 = por %p91, %p92
      %p94 = scmp.ne.s32.totalorder %s82, %s83
      %p95 = scmp.eq.s32.totalorder %s17, 3
      %p96 = por %p94, %p95
      %p98 = scmp.ne.s32.totalorder %s83, %s97
      %p99 = scmp.eq.s32.totalorder %s17, 0
      %p100 = por %p98, %p99
      %s102 = sadd.s32 %s101, 1
      %p105 = scmp.eq.s32.totalorder %s11, 3
      %p106 = scmp.ne.s32.totalorder %s101, %s103
      %p107 = scmp.eq.s32.totalorder %s11, 0
      %p108 = por %p106, %p107
      %p109 = scmp.ne.s32.totalorder %s101, %s103
      %p110 = scmp.eq.s32.totalorder %s16, 3
      %p111 = por %p109, %p110
      %p112 = scmp.ne.s32.totalorder %s103, %s104
      %p113 = scmp.eq.s32.totalorder %s16, 0
      %p114 = por %p112, %p113
      %p115 = scmp.ne.s32.totalorder %s103, %s104
      %p116 = scmp.eq.s32.totalorder %s17, 3
      %p117 = por %p115, %p116
      %p119 = scmp.ne.s32.totalorder %s104, %s118
      %p120 = scmp.eq.s32.totalorder %s17, 0
      %p121 = por %p119, %p120
      %s123 = sadd.s32 %s122, 1
      %p126 = scmp.eq.s32.totalorder %s11, 3
      %p127 = scmp.ne.s32.totalorder %s122, %s124
      %p128 = scmp.eq.s32.totalorder %s11, 0
      %p129 = por %p127, %p128
      %p130 = scmp.ne.s32.totalorder %s122, %s124
      %p131 = scmp.eq.s32.totalorder %s16, 3
      %p132 = por %p130, %p131
      %p133 = scmp.ne.s32.totalorder %s124, %s125
      %p134 = scmp.eq.s32.totalorder %s16, 0
      %p135 = por %p133, %p134
      %p136 = scmp.ne.s32.totalorder %s124, %s125
      %p137 = scmp.eq.s32.totalorder %s17, 3
      %p138 = por %p136, %p137
      %p140 = scmp.ne.s32.totalorder %s125, %s139
      %p141 = scmp.eq.s32.totalorder %s17, 0
      %p142 = por %p140, %p141
      %s143 = ssub.s32 %s18, %s30
      %p144 = scmp.eq.s32.totalorder %s143, 0
      %s146 = sadd.s32 %s145, 1
      %s147 = scalar_select %p144, %s145, %s146
      %p150 = pneg %p144
      %p151 = scmp.eq.s32.totalorder %s11, 3
      %p152 = por %p150, %p151
      %p153 = scmp.ne.s32.totalorder %s145, %s148
      %p154 = scmp.eq.s32.totalorder %s11, 0
      %p155 = por %p153, %p154
      %p156 = scmp.ne.s32.totalorder %s145, %s148
      %p157 = scmp.eq.s32.totalorder %s16, 3
      %p158 = por %p156, %p157
      %p159 = scmp.ne.s32.totalorder %s148, %s149
      %p160 = scmp.eq.s32.totalorder %s16, 0
      %p161 = por %p159, %p160
      %p162 = scmp.ne.s32.totalorder %s148, %s149
      %p163 = scmp.eq.s32.totalorder %s17, 3
      %p164 = por %p162, %p163
      %p166 = scmp.ne.s32.totalorder %s149, %s165
      %p167 = scmp.eq.s32.totalorder %s17, 0
      %p168 = por %p166, %p167
      %p169 = scmp.le.s32.totalorder 1, %s11
      %p170 = scmp.lt.s32.totalorder %s11, 5
      %p171 = pnand %p169, %p170
      %p172 = pneg %p171
      // Predicated region
      $region9: #{gcn_forward.3} parent=5 // pred_check
        _
      $region10: #{gcn_forward.3} parent=5 // pred_check_branch
        %174 = sbr.rel (%p171) target = $region12
      $region11: #{gcn_forward.3} parent=5 // pred_region
        %s175 = ssub.s32 %s11, 1
        // Predicated region
        $region13: #{gcn_forward.3} parent=11 // pred_check
          %p176 = pneg %p72
        $region14: #{gcn_forward.3} parent=11 // pred_check_branch
          %178 = sbr.rel (%p176) target = $region16
        $region15: #{gcn_forward.3} parent=11 // pred_region
          _
        $region16: #{gcn_forward.3} parent=11 // pred_fallthru
          _
        // Predicated region
        $region17: #{gcn_forward.3} parent=11 // pred_check
          %p179 = pneg %p93
        $region18: #{gcn_forward.3} parent=11 // pred_check_branch
          %181 = sbr.rel (%p179) target = $region20
        $region19: #{gcn_forward.3} parent=11 // pred_region
          _
        $region20: #{gcn_forward.3} parent=11 // pred_fallthru
          _
        // Predicated region
        $region21: #{gcn_forward.3} parent=11 // pred_check
          %p182 = pneg %p114
        $region22: #{gcn_forward.3} parent=11 // pred_check_branch
          %184 = sbr.rel (%p182) target = $region24
        $region23: #{gcn_forward.3} parent=11 // pred_region
          _
        $region24: #{gcn_forward.3} parent=11 // pred_fallthru
          _
        // Predicated region
        $region25: #{gcn_forward.3} parent=11 // pred_check
          %p185 = pneg %p135
        $region26: #{gcn_forward.3} parent=11 // pred_check_branch
          %187 = sbr.rel (%p185) target = $region28
        $region27: #{gcn_forward.3} parent=11 // pred_region
          _
        $region28: #{gcn_forward.3} parent=11 // pred_fallthru
          _
      $region12: #{gcn_forward.3} parent=5 // pred_fallthru
        _
      %p188 = scmp.lt.s32.totalorder %s11, 4
      // Predicated region
      $region29: #{gcn_forward.3} parent=5 // pred_check
        %p189 = pneg %p188
      $region30: #{gcn_forward.3} parent=5 // pred_check_branch
        %191 = sbr.rel (%p189) target = $region32
      $region31: #{gcn_forward.3} parent=5 // pred_region
        // Predicated region
        $region33: #{gcn_forward.3} parent=31 // pred_check
          %p192 = pneg %p45
        $region34: #{gcn_forward.3} parent=31 // pred_check_branch
          %194 = sbr.rel (%p192) target = $region36
        $region35: #{gcn_forward.3} parent=31 // pred_region
          %s195 = sand.u32 %s35, 1
          %s196 = sand.u32 %s35, 1
          %s197 = smul.addr %s196, 64
          %s198 = scalar_lea.vmem [#allocation3], %s197
          %s199 = smul.u32 16, %s18
          %s200 = smul.addr %s199, 2
          %s201 = sadd.s32 %s19, %s200
          %s202 = smul.addr %s201, 4
          %s203 = scalar_lea.vmem %s0, %s202
          // Predicated region
          $region37: #{gcn_forward.3} parent=35 // pred_check
            _
          $region38: #{gcn_forward.3} parent=35 // pred_check_branch
            %205 = sbr.rel (0) target = $region40
          $region39: #{gcn_forward.3} parent=35 // pred_region
            // Predicated region
            $region41: #{gcn_forward.3} parent=39 // pred_check
              _
            $region42: #{gcn_forward.3} parent=39 // pred_check_branch
              %207 = sbr.rel target = $region44
            $region43: #{gcn_forward.3} parent=39 // pred_region
              // Predicated region
              $region56: #{gcn_forward.3} parent=43 // pred_check
                _
              $region57: #{gcn_forward.3} parent=43 // pred_check_branch
                %252 = sbr.rel (0) target = $region59
              $region58: #{gcn_forward.3} parent=43 // pred_region
                loop: start=0, step=1, limit=1
                $region60: #{gcn_forward.3} parent=58 // loop_pre_header
                  _
                $region61: #{gcn_forward.3} parent=58 // loop_header
                  %s254 = sphi 0, %s258
                  %p255 = scmp.ge.s32.totalorder %s254, 1
                  %s259 = sphi %s203, %s203
                  %s260 = sphi %s198, %s198
                $region62: #{gcn_forward.3} parent=58 // loop_header_branch
                  %257 = sbr.rel (%p255) target = $region66
                $region63: #{gcn_forward.3} parent=58 // loop_body
                  _
                $region64: #{gcn_forward.3} parent=58 // loop_footer
                  %s258 = sadd.s32 1, %s254
                $region65: #{gcn_forward.3} parent=58 // loop_footer_branch
                  %253 = sbr.rel target = $region61
                $region66: #{gcn_forward.3} parent=58 // loop_exit
                  _
                loop: start=0, step=1, limit=1
                $region67: #{gcn_forward.3} parent=58 // loop_pre_header
                  _
                $region68: #{gcn_forward.3} parent=58 // loop_header
                  %s263 = sphi 0, %s267
                  %p264 = scmp.ge.s32.totalorder %s263, 1
                  %s268 = sphi %s203, %s203
                  %s269 = sphi %s198, %s198
                $region69: #{gcn_forward.3} parent=58 // loop_header_branch
                  %266 = sbr.rel (%p264) target = $region73
                $region70: #{gcn_forward.3} parent=58 // loop_body
                  %v270 = vld [vmem:[%s268] sm:$0xf]
                  %271 = vst [vmem:[%s269] sm:$0xf] %v270
                  %v272 = vld [vmem:[%s268 + $0x8] sm:$0xf]
                  %273 = vst [vmem:[%s269 + $0x4] sm:$0xf] %v272
                  %v274 = vld [vmem:[%s268 + $0x10] sm:$0xf]
                  %275 = vst [vmem:[%s269 + $0x8] sm:$0xf] %v274
                  %v276 = vld [vmem:[%s268 + $0x18] sm:$0xf]
                  %277 = vst [vmem:[%s269 + $0xc] sm:$0xf] %v276
                  %v278 = vld [vmem:[%s268 + $0x20] sm:$0xf]
                  %279 = vst [vmem:[%s269 + $0x10] sm:$0xf] %v278
                  %v280 = vld [vmem:[%s268 + $0x28] sm:$0xf]
                  %281 = vst [vmem:[%s269 + $0x14] sm:$0xf] %v280
                  %v282 = vld [vmem:[%s268 + $0x30] sm:$0xf]
                  %283 = vst [vmem:[%s269 + $0x18] sm:$0xf] %v282
                  %v284 = vld [vmem:[%s268 + $0x38] sm:$0xf]
                  %285 = vst [vmem:[%s269 + $0x1c] sm:$0xf] %v284
                  %v286 = vld [vmem:[%s268 + $0x40] sm:$0xf]
                  %287 = vst [vmem:[%s269 + $0x20] sm:$0xf] %v286
                  %v288 = vld [vmem:[%s268 + $0x48] sm:$0xf]
                  %289 = vst [vmem:[%s269 + $0x24] sm:$0xf] %v288
                  %v290 = vld [vmem:[%s268 + $0x50] sm:$0xf]
                  %291 = vst [vmem:[%s269 + $0x28] sm:$0xf] %v290
                  %v292 = vld [vmem:[%s268 + $0x58] sm:$0xf]
                  %293 = vst [vmem:[%s269 + $0x2c] sm:$0xf] %v292
                  %v294 = vld [vmem:[%s268 + $0x60] sm:$0xf]
                  %295 = vst [vmem:[%s269 + $0x30] sm:$0xf] %v294
                  %v296 = vld [vmem:[%s268 + $0x68] sm:$0xf]
                  %297 = vst [vmem:[%s269 + $0x34] sm:$0xf] %v296
                  %v298 = vld [vmem:[%s268 + $0x70] sm:$0xf]
                  %299 = vst [vmem:[%s269 + $0x38] sm:$0xf] %v298
                  %v300 = vld [vmem:[%s268 + $0x78] sm:$0xf]
                  %301 = vst [vmem:[%s269 + $0x3c] sm:$0xf] %v300
                $region71: #{gcn_forward.3} parent=58 // loop_footer
                  %s267 = sadd.s32 1, %s263
                $region72: #{gcn_forward.3} parent=58 // loop_footer_branch
                  %262 = sbr.rel target = $region68
                $region73: #{gcn_forward.3} parent=58 // loop_exit
                  _
              $region59: #{gcn_forward.3} parent=43 // pred_fallthru
                _
            $region44: #{gcn_forward.3} parent=39 // pred_fallthru
              _
            // Predicated region
            $region45: #{gcn_forward.3} parent=39 // pred_check
              _
            $region46: #{gcn_forward.3} parent=39 // pred_check_branch
              %209 = sbr.rel (0) target = $region48
            $region47: #{gcn_forward.3} parent=39 // pred_region
              loop: start=0, step=1, limit=1
              $region49: #{gcn_forward.3} parent=47 // loop_pre_header
                _
              $region50: #{gcn_forward.3} parent=47 // loop_header
                %s212 = sphi 0, %s216
                %p213 = scmp.ge.s32.totalorder %s212, 1
                %s217 = sphi %s203, %s203
                %s218 = sphi %s198, %s198
              $region51: #{gcn_forward.3} parent=47 // loop_header_branch
                %215 = sbr.rel (%p213) target = $region55
              $region52: #{gcn_forward.3} parent=47 // loop_body
                %v219 = vld [vmem:[%s217] sm:$0xf]
                %220 = vst [vmem:[%s218] sm:$0xf] %v219
                %v221 = vld [vmem:[%s217 + $0x8] sm:$0xf]
                %222 = vst [vmem:[%s218 + $0x4] sm:$0xf] %v221
                %v223 = vld [vmem:[%s217 + $0x10] sm:$0xf]
                %224 = vst [vmem:[%s218 + $0x8] sm:$0xf] %v223
                %v225 = vld [vmem:[%s217 + $0x18] sm:$0xf]
                %226 = vst [vmem:[%s218 + $0xc] sm:$0xf] %v225
                %v227 = vld [vmem:[%s217 + $0x20] sm:$0xf]
                %228 = vst [vmem:[%s218 + $0x10] sm:$0xf] %v227
                %v229 = vld [vmem:[%s217 + $0x28] sm:$0xf]
                %230 = vst [vmem:[%s218 + $0x14] sm:$0xf] %v229
                %v231 = vld [vmem:[%s217 + $0x30] sm:$0xf]
                %232 = vst [vmem:[%s218 + $0x18] sm:$0xf] %v231
                %v233 = vld [vmem:[%s217 + $0x38] sm:$0xf]
                %234 = vst [vmem:[%s218 + $0x1c] sm:$0xf] %v233
                %v235 = vld [vmem:[%s217 + $0x40] sm:$0xf]
                %236 = vst [vmem:[%s218 + $0x20] sm:$0xf] %v235
                %v237 = vld [vmem:[%s217 + $0x48] sm:$0xf]
                %238 = vst [vmem:[%s218 + $0x24] sm:$0xf] %v237
                %v239 = vld [vmem:[%s217 + $0x50] sm:$0xf]
                %240 = vst [vmem:[%s218 + $0x28] sm:$0xf] %v239
                %v241 = vld [vmem:[%s217 + $0x58] sm:$0xf]
                %242 = vst [vmem:[%s218 + $0x2c] sm:$0xf] %v241
                %v243 = vld [vmem:[%s217 + $0x60] sm:$0xf]
                %244 = vst [vmem:[%s218 + $0x30] sm:$0xf] %v243
                %v245 = vld [vmem:[%s217 + $0x68] sm:$0xf]
                %246 = vst [vmem:[%s218 + $0x34] sm:$0xf] %v245
                %v247 = vld [vmem:[%s217 + $0x70] sm:$0xf]
                %248 = vst [vmem:[%s218 + $0x38] sm:$0xf] %v247
                %v249 = vld [vmem:[%s217 + $0x78] sm:$0xf]
                %250 = vst [vmem:[%s218 + $0x3c] sm:$0xf] %v249
              $region53: #{gcn_forward.3} parent=47 // loop_footer
                %s216 = sadd.s32 1, %s212
              $region54: #{gcn_forward.3} parent=47 // loop_footer_branch
                %211 = sbr.rel target = $region50
              $region55: #{gcn_forward.3} parent=47 // loop_exit
                _
            $region48: #{gcn_forward.3} parent=39 // pred_fallthru
              _
          $region40: #{gcn_forward.3} parent=35 // pred_fallthru
            _
          %302 = vnop
        $region36: #{gcn_forward.3} parent=31 // pred_fallthru
          _
      $region32: #{gcn_forward.3} parent=5 // pred_fallthru
        _
      %p303 = scmp.le.s32.totalorder 1, %s11
      %p304 = scmp.lt.s32.totalorder %s11, 5
      %p305 = pnand %p303, %p304
      %p306 = pneg %p305
      // Predicated region
      $region74: #{gcn_forward.3} parent=5 // pred_check
        _
      $region75: #{gcn_forward.3} parent=5 // pred_check_branch
        %308 = sbr.rel (%p305) target = $region77
      $region76: #{gcn_forward.3} parent=5 // pred_region
        %s309 = ssub.s32 %s11, 1
        %s310 = sand.u32 %s38, 1
        %s311 = sand.u32 %s38, 1
        %s312 = smul.addr %s311, 64
        %s313 = scalar_lea.vmem [#allocation3], %s312
        // Predicated region
        $region78: #{gcn_forward.3} parent=76 // pred_check
          %p314 = pneg %p51
        $region79: #{gcn_forward.3} parent=76 // pred_check_branch
          %316 = sbr.rel (%p314) target = $region81
        $region80: #{gcn_forward.3} parent=76 // pred_region
          _
        $region81: #{gcn_forward.3} parent=76 // pred_fallthru
          _
        %s317 = sand.u32 %s38, 1
        %s318 = sand.u32 %s38, 1
        %s319 = smul.addr %s318, 64
        %s320 = scalar_lea.vmem [#allocation3], %s319
        %p321 = pneg %p51
        %p322 = pneg %p48
        %p323 = pneg %p72
        %p324 = pneg %p69
        %p325 = pneg %p93
        %p326 = pneg %p90
        %p327 = pneg %p114
        %p328 = pneg %p111
        %p329 = pneg %p135
        %p330 = pneg %p132
        %p331 = pneg %p161
        %p332 = pneg %p158
        %s333 = smul.u32 16, %s20
        %p334 = scmp.lt.s32.totalorder %s333, 31
        %s335 = scalar_select %p334, %s333, 31
        %s336 = smul.addr %s335, 8
        %s337 = scalar_lea.vmem %s5, %s336
        %s338 = smul.u32 16, %s20
        %s339 = smul.u32 16, %s20
        %p340 = scmp.lt.s32.totalorder %s339, 31
        %s341 = scalar_select %p340, %s339, 31
        %s342 = smul.addr %s341, 8
        %s343 = scalar_lea.vmem %s5, %s342
        %s344 = smul.u32 16, %s20
        %p346 = scmp.eq.s32.totalorder %s21, 0
        // Predicated region
        $region82: #{gcn_forward.3} parent=76 // pred_check
          %p347 = pneg %p346
        $region83: #{gcn_forward.3} parent=76 // pred_check_branch
          %349 = sbr.rel (%p347) target = $region85
        $region84: #{gcn_forward.3} parent=76 // pred_region
          %350 = vst [vmem:[#allocation2] sm:$0xff] 0.0
          %351 = vst [vmem:[#allocation2 + $0x8] sm:$0xff] 0.0
          %352 = vst [vmem:[#allocation2 + $0x10] sm:$0xff] 0.0
          %353 = vst [vmem:[#allocation2 + $0x18] sm:$0xff] 0.0
          %354 = vst [vmem:[#allocation2 + $0x20] sm:$0xff] 0.0
          %355 = vst [vmem:[#allocation2 + $0x28] sm:$0xff] 0.0
          %356 = vst [vmem:[#allocation2 + $0x30] sm:$0xff] 0.0
          %357 = vst [vmem:[#allocation2 + $0x38] sm:$0xff] 0.0
          %358 = vst [vmem:[#allocation2 + $0x40] sm:$0xff] 0.0
          %359 = vst [vmem:[#allocation2 + $0x48] sm:$0xff] 0.0
          %360 = vst [vmem:[#allocation2 + $0x50] sm:$0xff] 0.0
          %361 = vst [vmem:[#allocation2 + $0x58] sm:$0xff] 0.0
          %362 = vst [vmem:[#allocation2 + $0x60] sm:$0xff] 0.0
          %363 = vst [vmem:[#allocation2 + $0x68] sm:$0xff] 0.0
          %364 = vst [vmem:[#allocation2 + $0x70] sm:$0xff] 0.0
          %365 = vst [vmem:[#allocation2 + $0x78] sm:$0xff] 0.0
        $region85: #{gcn_forward.3} parent=76 // pred_fallthru
          _
        %s366 = smul.u32 %s21, 128
        %v367 = vld [vmem:[#allocation2] sm:$0xff]
        %v368 = vld [vmem:[#allocation2 + $0x8] sm:$0xff]
        %v369 = vld [vmem:[#allocation2 + $0x10] sm:$0xff]
        %v370 = vld [vmem:[#allocation2 + $0x18] sm:$0xff]
        %v371 = vld [vmem:[#allocation2 + $0x20] sm:$0xff]
        %v372 = vld [vmem:[#allocation2 + $0x28] sm:$0xff]
        %v373 = vld [vmem:[#allocation2 + $0x30] sm:$0xff]
        %v374 = vld [vmem:[#allocation2 + $0x38] sm:$0xff]
        %v375 = vld [vmem:[#allocation2 + $0x40] sm:$0xff]
        %v376 = vld [vmem:[#allocation2 + $0x48] sm:$0xff]
        %v377 = vld [vmem:[#allocation2 + $0x50] sm:$0xff]
        %v378 = vld [vmem:[#allocation2 + $0x58] sm:$0xff]
        %v379 = vld [vmem:[#allocation2 + $0x60] sm:$0xff]
        %v380 = vld [vmem:[#allocation2 + $0x68] sm:$0xff]
        %v381 = vld [vmem:[#allocation2 + $0x70] sm:$0xff]
        %v382 = vld [vmem:[#allocation2 + $0x78] sm:$0xff]
        %v383 = vld [vmem:[%s313] sm:$0xf]
        %v384 = vld [vmem:[%s313 + $0x4] sm:$0xf]
        %v385 = vld [vmem:[%s313 + $0x8] sm:$0xf]
        %v386 = vld [vmem:[%s313 + $0xc] sm:$0xf]
        %v387 = vld [vmem:[%s313 + $0x10] sm:$0xf]
        %v388 = vld [vmem:[%s313 + $0x14] sm:$0xf]
        %v389 = vld [vmem:[%s313 + $0x18] sm:$0xf]
        %v390 = vld [vmem:[%s313 + $0x1c] sm:$0xf]
        %v391 = vld [vmem:[%s313 + $0x20] sm:$0xf]
        %v392 = vld [vmem:[%s313 + $0x24] sm:$0xf]
        %v393 = vld [vmem:[%s313 + $0x28] sm:$0xf]
        %v394 = vld [vmem:[%s313 + $0x2c] sm:$0xf]
        %v395 = vld [vmem:[%s313 + $0x30] sm:$0xf]
        %v396 = vld [vmem:[%s313 + $0x34] sm:$0xf]
        %v397 = vld [vmem:[%s313 + $0x38] sm:$0xf]
        %v398 = vld [vmem:[%s313 + $0x3c] sm:$0xf]
        %s399 = sshra.s32 %s366, 3
        %s400 = sand.u32 %s366, 7
        %s401 = smul.addr %s399, 4
        %s402 = scalar_lea.vmem %s1, %s401
        %v403 = vld [vmem:[%s402] sm:$0xf]
        %v404 = vld [vmem:[%s402 + $0x4] sm:$0xf]
        %v405 = vld [vmem:[%s402 + $0x8] sm:$0xf]
        %v406 = vld [vmem:[%s402 + $0xc] sm:$0xf]
        %v407 = vld [vmem:[%s402 + $0x10] sm:$0xf]
        %v408 = vld [vmem:[%s402 + $0x14] sm:$0xf]
        %v409 = vld [vmem:[%s402 + $0x18] sm:$0xf]
        %v410 = vld [vmem:[%s402 + $0x1c] sm:$0xf]
        %v411 = vld [vmem:[%s402 + $0x20] sm:$0xf]
        %v412 = vld [vmem:[%s402 + $0x24] sm:$0xf]
        %v413 = vld [vmem:[%s402 + $0x28] sm:$0xf]
        %v414 = vld [vmem:[%s402 + $0x2c] sm:$0xf]
        %v415 = vld [vmem:[%s402 + $0x30] sm:$0xf]
        %v416 = vld [vmem:[%s402 + $0x34] sm:$0xf]
        %v417 = vld [vmem:[%s402 + $0x38] sm:$0xf]
        %v418 = vld [vmem:[%s402 + $0x3c] sm:$0xf]
        %v435 = vunpack.c.l.b16 %v383
        %v436 = vunpack.c.l.b16 %v384
        %v437 = vunpack.c.l.b16 %v385
        %v438 = vunpack.c.l.b16 %v386
        %v439 = vunpack.c.l.b16 %v387
        %v440 = vunpack.c.l.b16 %v388
        %v441 = vunpack.c.l.b16 %v389
        %v442 = vunpack.c.l.b16 %v390
        %v443 = vunpack.c.l.b16 %v391
        %v444 = vunpack.c.l.b16 %v392
        %v445 = vunpack.c.l.b16 %v393
        %v446 = vunpack.c.l.b16 %v394
        %v447 = vunpack.c.l.b16 %v395
        %v448 = vunpack.c.l.b16 %v396
        %v449 = vunpack.c.l.b16 %v397
        %v450 = vunpack.c.l.b16 %v398
        %v451 = vpack.c.b16 %v436, %v435
        %v452 = vpack.c.b16 %v438, %v437
        %v453 = vpack.c.b16 %v440, %v439
        %v454 = vpack.c.b16 %v442, %v441
        %v455 = vpack.c.b16 %v444, %v443
        %v456 = vpack.c.b16 %v446, %v445
        %v457 = vpack.c.b16 %v448, %v447
        %v458 = vpack.c.b16 %v450, %v449
        %v483 = vunpack.c.l.b16 %v403
        %v484 = vunpack.c.l.b16 %v404
        %v485 = vunpack.c.l.b16 %v405
        %v486 = vunpack.c.l.b16 %v406
        %v487 = vunpack.c.l.b16 %v407
        %v488 = vunpack.c.l.b16 %v408
        %v489 = vunpack.c.l.b16 %v409
        %v490 = vunpack.c.l.b16 %v410
        %v491 = vunpack.c.l.b16 %v411
        %v492 = vunpack.c.l.b16 %v412
        %v493 = vunpack.c.l.b16 %v413
        %v494 = vunpack.c.l.b16 %v414
        %v495 = vunpack.c.l.b16 %v415
        %v496 = vunpack.c.l.b16 %v416
        %v497 = vunpack.c.l.b16 %v417
        %v498 = vunpack.c.l.b16 %v418
        %v499 = vpack.c.b16 %v484, %v483
        %v500 = vpack.c.b16 %v486, %v485
        %v501 = vpack.c.b16 %v488, %v487
        %v502 = vpack.c.b16 %v490, %v489
        %v503 = vpack.c.b16 %v492, %v491
        %v504 = vpack.c.b16 %v494, %v493
        %v505 = vpack.c.b16 %v496, %v495
        %v506 = vpack.c.b16 %v498, %v497
        %515 = vmatprep.subr.bf16.mxu0 0
        %516 = vmatpush1.bf16.msra.mxu0 %v499
        %517 = vmatprep.subr.bf16.mxu0 0
        %518 = vmatpush1.bf16.msra.mxu0 %v500
        %519 = vmatprep.subr.bf16.mxu0 0
        %520 = vmatpush1.bf16.msra.mxu0 %v501
        %521 = vmatprep.subr.bf16.mxu0 0
        %522 = vmatpush1.bf16.msra.mxu0 %v502
        %523 = vmatprep.subr.bf16.mxu0 0
        %524 = vmatpush1.bf16.msra.mxu0 %v503
        %525 = vmatprep.subr.bf16.mxu0 0
        %526 = vmatpush1.bf16.msra.mxu0 %v504
        %527 = vmatprep.subr.bf16.mxu0 0
        %528 = vmatpush1.bf16.msra.mxu0 %v505
        %529 = vmatprep.subr.bf16.mxu0 0
        %530 = vmatpush1.bf16.msra.mxu0 %v506
        %531 = vmatprep.subr.bf16.mxu0 0
        %532 = vmatpush1.bf16.msra.mxu0 0
        %533 = vmatprep.subr.bf16.mxu0 0
        %534 = vmatpush1.bf16.msra.mxu0 0
        %535 = vmatprep.subr.bf16.mxu0 0
        %536 = vmatpush1.bf16.msra.mxu0 0
        %537 = vmatprep.subr.bf16.mxu0 0
        %538 = vmatpush1.bf16.msra.mxu0 0
        %539 = vmatprep.subr.bf16.mxu0 0
        %540 = vmatpush1.bf16.msra.mxu0 0
        %541 = vmatprep.subr.bf16.mxu0 0
        %542 = vmatpush1.bf16.msra.mxu0 0
        %543 = vmatprep.subr.bf16.mxu0 0
        %544 = vmatpush1.bf16.msra.mxu0 0
        %545 = vmatprep.subr.bf16.mxu0 0
        %546 = vmatpush1.bf16.msra.mxu0 0
        %547 = vmatprep.mubr.bf16.mxu0 0
        %548 = vmatmul.mubr.bf16.gmra.mrb[0].mxu0 %v451
        %v549 = vpop.f32.mrb[0].mxu0
        %v550 = vadd.f32 0.0, %v549
        %v551 = vpop.f32.mrb[0].mxu0
        %v552 = vpop.f32.mrb[0].mxu0
        %v553 = vadd.f32 0.0, %v552
        %v554 = vpop.f32.mrb[0].mxu0
        %555 = vmatprep.mubr.bf16.mxu0 0
        %556 = vmatmul.mubr.bf16.gmra.mrb[0].mxu0 %v452
        %v557 = vpop.f32.mrb[0].mxu0
        %v558 = vadd.f32 0.0, %v557
        %v559 = vpop.f32.mrb[0].mxu0
        %v560 = vpop.f32.mrb[0].mxu0
        %v561 = vadd.f32 0.0, %v560
        %v562 = vpop.f32.mrb[0].mxu0
        %563 = vmatprep.mubr.bf16.mxu0 0
        %564 = vmatmul.mubr.bf16.gmra.mrb[0].mxu0 %v453
        %v565 = vpop.f32.mrb[0].mxu0
        %v566 = vadd.f32 0.0, %v565
        %v567 = vpop.f32.mrb[0].mxu0
        %v568 = vpop.f32.mrb[0].mxu0
        %v569 = vadd.f32 0.0, %v568
        %v570 = vpop.f32.mrb[0].mxu0
        %571 = vmatprep.mubr.bf16.mxu0 0
        %572 = vmatmul.mubr.bf16.gmra.mrb[0].mxu0 %v454
        %v573 = vpop.f32.mrb[0].mxu0
        %v574 = vadd.f32 0.0, %v573
        %v575 = vpop.f32.mrb[0].mxu0
        %v576 = vpop.f32.mrb[0].mxu0
        %v577 = vadd.f32 0.0, %v576
        %v578 = vpop.f32.mrb[0].mxu0
        %579 = vmatprep.mubr.bf16.mxu0 0
        %580 = vmatmul.mubr.bf16.gmra.mrb[0].mxu0 %v455
        %v581 = vpop.f32.mrb[0].mxu0
        %v582 = vadd.f32 0.0, %v581
        %v583 = vpop.f32.mrb[0].mxu0
        %v584 = vpop.f32.mrb[0].mxu0
        %v585 = vadd.f32 0.0, %v584
        %v586 = vpop.f32.mrb[0].mxu0
        %587 = vmatprep.mubr.bf16.mxu0 0
        %588 = vmatmul.mubr.bf16.gmra.mrb[0].mxu0 %v456
        %v589 = vpop.f32.mrb[0].mxu0
        %v590 = vadd.f32 0.0, %v589
        %v591 = vpop.f32.mrb[0].mxu0
        %v592 = vpop.f32.mrb[0].mxu0
        %v593 = vadd.f32 0.0, %v592
        %v594 = vpop.f32.mrb[0].mxu0
        %595 = vmatprep.mubr.bf16.mxu0 0
        %596 = vmatmul.mubr.bf16.gmra.mrb[0].mxu0 %v457
        %v597 = vpop.f32.mrb[0].mxu0
        %v598 = vadd.f32 0.0, %v597
        %v599 = vpop.f32.mrb[0].mxu0
        %v600 = vpop.f32.mrb[0].mxu0
        %v601 = vadd.f32 0.0, %v600
        %v602 = vpop.f32.mrb[0].mxu0
        %603 = vmatprep.mubr.bf16.mxu0 0
        %604 = vmatmul.mubr.bf16.gmra.mrb[0].mxu0 %v458
        %v605 = vpop.f32.mrb[0].mxu0
        %v606 = vadd.f32 0.0, %v605
        %v607 = vpop.f32.mrb[0].mxu0
        %v608 = vpop.f32.mrb[0].mxu0
        %v609 = vadd.f32 0.0, %v608
        %v610 = vpop.f32.mrb[0].mxu0
        %611 = vdwg.mxu0
        %v612 = vadd.f32 %v367, %v550
        %v613 = vadd.f32 %v368, %v553
        %v614 = vadd.f32 %v369, %v558
        %v615 = vadd.f32 %v370, %v561
        %v616 = vadd.f32 %v371, %v566
        %v617 = vadd.f32 %v372, %v569
        %v618 = vadd.f32 %v373, %v574
        %v619 = vadd.f32 %v374, %v577
        %v620 = vadd.f32 %v375, %v582
        %v621 = vadd.f32 %v376, %v585
        %v622 = vadd.f32 %v377, %v590
        %v623 = vadd.f32 %v378, %v593
        %v624 = vadd.f32 %v379, %v598
        %v625 = vadd.f32 %v380, %v601
        %v626 = vadd.f32 %v381, %v606
        %v627 = vadd.f32 %v382, %v609
        %628 = vst [vmem:[#allocation2] sm:$0xff] %v612
        %629 = vst [vmem:[#allocation2 + $0x8] sm:$0xff] %v613
        %630 = vst [vmem:[#allocation2 + $0x10] sm:$0xff] %v614
        %631 = vst [vmem:[#allocation2 + $0x18] sm:$0xff] %v615
        %632 = vst [vmem:[#allocation2 + $0x20] sm:$0xff] %v616
        %633 = vst [vmem:[#allocation2 + $0x28] sm:$0xff] %v617
        %634 = vst [vmem:[#allocation2 + $0x30] sm:$0xff] %v618
        %635 = vst [vmem:[#allocation2 + $0x38] sm:$0xff] %v619
        %636 = vst [vmem:[#allocation2 + $0x40] sm:$0xff] %v620
        %637 = vst [vmem:[#allocation2 + $0x48] sm:$0xff] %v621
        %638 = vst [vmem:[#allocation2 + $0x50] sm:$0xff] %v622
        %639 = vst [vmem:[#allocation2 + $0x58] sm:$0xff] %v623
        %640 = vst [vmem:[#allocation2 + $0x60] sm:$0xff] %v624
        %641 = vst [vmem:[#allocation2 + $0x68] sm:$0xff] %v625
        %642 = vst [vmem:[#allocation2 + $0x70] sm:$0xff] %v626
        %643 = vst [vmem:[#allocation2 + $0x78] sm:$0xff] %v627
        %p644 = scmp.eq.s32.totalorder %s21, 1
        // Predicated region
        $region86: #{gcn_forward.3} parent=76 // pred_check
          %p645 = pneg %p644
        $region87: #{gcn_forward.3} parent=76 // pred_check_branch
          %647 = sbr.rel (%p645) target = $region89
        $region88: #{gcn_forward.3} parent=76 // pred_region
          %v648 = vld [vmem:[#allocation2] sm:$0xff]
          %v649 = vld [vmem:[#allocation2 + $0x8] sm:$0xff]
          %v650 = vld [vmem:[#allocation2 + $0x10] sm:$0xff]
          %v651 = vld [vmem:[#allocation2 + $0x18] sm:$0xff]
          %v652 = vld [vmem:[#allocation2 + $0x20] sm:$0xff]
          %v653 = vld [vmem:[#allocation2 + $0x28] sm:$0xff]
          %v654 = vld [vmem:[#allocation2 + $0x30] sm:$0xff]
          %v655 = vld [vmem:[#allocation2 + $0x38] sm:$0xff]
          %v656 = vld [vmem:[#allocation2 + $0x40] sm:$0xff]
          %v657 = vld [vmem:[#allocation2 + $0x48] sm:$0xff]
          %v658 = vld [vmem:[#allocation2 + $0x50] sm:$0xff]
          %v659 = vld [vmem:[#allocation2 + $0x58] sm:$0xff]
          %v660 = vld [vmem:[#allocation2 + $0x60] sm:$0xff]
          %v661 = vld [vmem:[#allocation2 + $0x68] sm:$0xff]
          %v662 = vld [vmem:[#allocation2 + $0x70] sm:$0xff]
          %v663 = vld [vmem:[#allocation2 + $0x78] sm:$0xff]
          %v664 = vld [vmem:[%s2] sm:$0x1]
          %v666 = vlaneseq
          %v667 = vshrl.u32 %v666, 7
          %v668 = vsub.s32 0, %v667
          %v669 = vrot.slane %v664, %v668
          %v671 = vadd.f32 %v648, %v669
          %v672 = vadd.f32 %v649, %v669
          %v673 = vadd.f32 %v650, %v669
          %v674 = vadd.f32 %v651, %v669
          %v675 = vadd.f32 %v652, %v669
          %v676 = vadd.f32 %v653, %v669
          %v677 = vadd.f32 %v654, %v669
          %v678 = vadd.f32 %v655, %v669
          %v679 = vadd.f32 %v656, %v669
          %v680 = vadd.f32 %v657, %v669
          %v681 = vadd.f32 %v658, %v669
          %v682 = vadd.f32 %v659, %v669
          %v683 = vadd.f32 %v660, %v669
          %v684 = vadd.f32 %v661, %v669
          %v685 = vadd.f32 %v662, %v669
          %v686 = vadd.f32 %v663, %v669
          %v687 = vmax.f32 %v671, 0.0
          %v688 = vmax.f32 %v672, 0.0
          %v689 = vmax.f32 %v673, 0.0
          %v690 = vmax.f32 %v674, 0.0
          %v691 = vmax.f32 %v675, 0.0
          %v692 = vmax.f32 %v676, 0.0
          %v693 = vmax.f32 %v677, 0.0
          %v694 = vmax.f32 %v678, 0.0
          %v695 = vmax.f32 %v679, 0.0
          %v696 = vmax.f32 %v680, 0.0
          %v697 = vmax.f32 %v681, 0.0
          %v698 = vmax.f32 %v682, 0.0
          %v699 = vmax.f32 %v683, 0.0
          %v700 = vmax.f32 %v684, 0.0
          %v701 = vmax.f32 %v685, 0.0
          %v702 = vmax.f32 %v686, 0.0
          %v703 = vpack.c.bf16 %v688, %v687
          %v704 = vpack.c.bf16 %v690, %v689
          %v705 = vpack.c.bf16 %v692, %v691
          %v706 = vpack.c.bf16 %v694, %v693
          %v707 = vpack.c.bf16 %v696, %v695
          %v708 = vpack.c.bf16 %v698, %v697
          %v709 = vpack.c.bf16 %v700, %v699
          %v710 = vpack.c.bf16 %v702, %v701
          %v711 = vld [vmem:[%s3] sm:$0xf]
          %v712 = vld [vmem:[%s3 + $0x4] sm:$0xf]
          %v713 = vld [vmem:[%s3 + $0x8] sm:$0xf]
          %v714 = vld [vmem:[%s3 + $0xc] sm:$0xf]
          %v715 = vld [vmem:[%s3 + $0x10] sm:$0xf]
          %v716 = vld [vmem:[%s3 + $0x14] sm:$0xf]
          %v717 = vld [vmem:[%s3 + $0x18] sm:$0xf]
          %v718 = vld [vmem:[%s3 + $0x1c] sm:$0xf]
          %v719 = vld [vmem:[%s3 + $0x20] sm:$0xf]
          %v720 = vld [vmem:[%s3 + $0x24] sm:$0xf]
          %v721 = vld [vmem:[%s3 + $0x28] sm:$0xf]
          %v722 = vld [vmem:[%s3 + $0x2c] sm:$0xf]
          %v723 = vld [vmem:[%s3 + $0x30] sm:$0xf]
          %v724 = vld [vmem:[%s3 + $0x34] sm:$0xf]
          %v725 = vld [vmem:[%s3 + $0x38] sm:$0xf]
          %v726 = vld [vmem:[%s3 + $0x3c] sm:$0xf]
          %v727 = vld [vmem:[%s4] sm:$0x1]
          %v729 = vlaneseq
          %v730 = vshrl.u32 %v729, 7
          %v731 = vsub.s32 0, %v730
          %v732 = vrot.slane %v727, %v731
          %v750 = vunpack.c.l.b16 %v711
          %v751 = vunpack.c.l.b16 %v712
          %v752 = vunpack.c.l.b16 %v713
          %v753 = vunpack.c.l.b16 %v714
          %v754 = vunpack.c.l.b16 %v715
          %v755 = vunpack.c.l.b16 %v716
          %v756 = vunpack.c.l.b16 %v717
          %v757 = vunpack.c.l.b16 %v718
          %v758 = vunpack.c.l.b16 %v719
          %v759 = vunpack.c.l.b16 %v720
          %v760 = vunpack.c.l.b16 %v721
          %v761 = vunpack.c.l.b16 %v722
          %v762 = vunpack.c.l.b16 %v723
          %v763 = vunpack.c.l.b16 %v724
          %v764 = vunpack.c.l.b16 %v725
          %v765 = vunpack.c.l.b16 %v726
          %v766 = vpack.c.b16 %v751, %v750
          %v767 = vpack.c.b16 %v753, %v752
          %v768 = vpack.c.b16 %v755, %v754
          %v769 = vpack.c.b16 %v757, %v756
          %v770 = vpack.c.b16 %v759, %v758
          %v771 = vpack.c.b16 %v761, %v760
          %v772 = vpack.c.b16 %v763, %v762
          %v773 = vpack.c.b16 %v765, %v764
          %782 = vmatprep.subr.bf16.mxu0 0
          %783 = vmatpush1.bf16.msra.mxu0 %v766
          %784 = vmatprep.subr.bf16.mxu0 0
          %785 = vmatpush1.bf16.msra.mxu0 %v767
          %786 = vmatprep.subr.bf16.mxu0 0
          %787 = vmatpush1.bf16.msra.mxu0 %v768
          %788 = vmatprep.subr.bf16.mxu0 0
          %789 = vmatpush1.bf16.msra.mxu0 %v769
          %790 = vmatprep.subr.bf16.mxu0 0
          %791 = vmatpush1.bf16.msra.mxu0 %v770
          %792 = vmatprep.subr.bf16.mxu0 0
          %793 = vmatpush1.bf16.msra.mxu0 %v771
          %794 = vmatprep.subr.bf16.mxu0 0
          %795 = vmatpush1.bf16.msra.mxu0 %v772
          %796 = vmatprep.subr.bf16.mxu0 0
          %797 = vmatpush1.bf16.msra.mxu0 %v773
          %798 = vmatprep.subr.bf16.mxu0 0
          %799 = vmatpush1.bf16.msra.mxu0 0
          %800 = vmatprep.subr.bf16.mxu0 0
          %801 = vmatpush1.bf16.msra.mxu0 0
          %802 = vmatprep.subr.bf16.mxu0 0
          %803 = vmatpush1.bf16.msra.mxu0 0
          %804 = vmatprep.subr.bf16.mxu0 0
          %805 = vmatpush1.bf16.msra.mxu0 0
          %806 = vmatprep.subr.bf16.mxu0 0
          %807 = vmatpush1.bf16.msra.mxu0 0
          %808 = vmatprep.subr.bf16.mxu0 0
          %809 = vmatpush1.bf16.msra.mxu0 0
          %810 = vmatprep.subr.bf16.mxu0 0
          %811 = vmatpush1.bf16.msra.mxu0 0
          %812 = vmatprep.subr.bf16.mxu0 0
          %813 = vmatpush1.bf16.msra.mxu0 0
          %814 = vmatprep.mubr.bf16.mxu0 0
          %815 = vmatmul.mubr.bf16.gmra.mrb[0].mxu0 %v703
          %v816 = vpop.f32.mrb[0].mxu0
          %v817 = vadd.f32 %v732, %v816
          %v818 = vpop.f32.mrb[0].mxu0
          %v819 = vpop.f32.mrb[0].mxu0
          %v820 = vadd.f32 %v732, %v819
          %v821 = vpop.f32.mrb[0].mxu0
          %822 = vmatprep.mubr.bf16.mxu0 0
          %823 = vmatmul.mubr.bf16.gmra.mrb[0].mxu0 %v704
          %v824 = vpop.f32.mrb[0].mxu0
          %v825 = vadd.f32 %v732, %v824
          %v826 = vpop.f32.mrb[0].mxu0
          %v827 = vpop.f32.mrb[0].mxu0
          %v828 = vadd.f32 %v732, %v827
          %v829 = vpop.f32.mrb[0].mxu0
          %830 = vmatprep.mubr.bf16.mxu0 0
          %831 = vmatmul.mubr.bf16.gmra.mrb[0].mxu0 %v705
          %v832 = vpop.f32.mrb[0].mxu0
          %v833 = vadd.f32 %v732, %v832
          %v834 = vpop.f32.mrb[0].mxu0
          %v835 = vpop.f32.mrb[0].mxu0
          %v836 = vadd.f32 %v732, %v835
          %v837 = vpop.f32.mrb[0].mxu0
          %838 = vmatprep.mubr.bf16.mxu0 0
          %839 = vmatmul.mubr.bf16.gmra.mrb[0].mxu0 %v706
          %v840 = vpop.f32.mrb[0].mxu0
          %v841 = vadd.f32 %v732, %v840
          %v842 = vpop.f32.mrb[0].mxu0
          %v843 = vpop.f32.mrb[0].mxu0
          %v844 = vadd.f32 %v732, %v843
          %v845 = vpop.f32.mrb[0].mxu0
          %846 = vmatprep.mubr.bf16.mxu0 0
          %847 = vmatmul.mubr.bf16.gmra.mrb[0].mxu0 %v707
          %v848 = vpop.f32.mrb[0].mxu0
          %v849 = vadd.f32 %v732, %v848
          %v850 = vpop.f32.mrb[0].mxu0
          %v851 = vpop.f32.mrb[0].mxu0
          %v852 = vadd.f32 %v732, %v851
          %v853 = vpop.f32.mrb[0].mxu0
          %854 = vmatprep.mubr.bf16.mxu0 0
          %855 = vmatmul.mubr.bf16.gmra.mrb[0].mxu0 %v708
          %v856 = vpop.f32.mrb[0].mxu0
          %v857 = vadd.f32 %v732, %v856
          %v858 = vpop.f32.mrb[0].mxu0
          %v859 = vpop.f32.mrb[0].mxu0
          %v860 = vadd.f32 %v732, %v859
          %v861 = vpop.f32.mrb[0].mxu0
          %862 = vmatprep.mubr.bf16.mxu0 0
          %863 = vmatmul.mubr.bf16.gmra.mrb[0].mxu0 %v709
          %v864 = vpop.f32.mrb[0].mxu0
          %v865 = vadd.f32 %v732, %v864
          %v866 = vpop.f32.mrb[0].mxu0
          %v867 = vpop.f32.mrb[0].mxu0
          %v868 = vadd.f32 %v732, %v867
          %v869 = vpop.f32.mrb[0].mxu0
          %870 = vmatprep.mubr.bf16.mxu0 0
          %871 = vmatmul.mubr.bf16.gmra.mrb[0].mxu0 %v710
          %v872 = vpop.f32.mrb[0].mxu0
          %v873 = vadd.f32 %v732, %v872
          %v874 = vpop.f32.mrb[0].mxu0
          %v875 = vpop.f32.mrb[0].mxu0
          %v876 = vadd.f32 %v732, %v875
          %v877 = vpop.f32.mrb[0].mxu0
          %878 = vdwg.mxu0
          %v879 = vlaneseq
          %v880 = vand.u32 %v879, 127
          %vm881 = vcmp.lt.s32.totalorder %v880, 4
          %v882 = vsel %vm881, %v817, -1e+30
          %v883 = vsel %vm881, %v820, -1e+30
          %v884 = vsel %vm881, %v825, -1e+30
          %v885 = vsel %vm881, %v828, -1e+30
          %v886 = vsel %vm881, %v833, -1e+30
          %v887 = vsel %vm881, %v836, -1e+30
          %v888 = vsel %vm881, %v841, -1e+30
          %v889 = vsel %vm881, %v844, -1e+30
          %v890 = vsel %vm881, %v849, -1e+30
          %v891 = vsel %vm881, %v852, -1e+30
          %v892 = vsel %vm881, %v857, -1e+30
          %v893 = vsel %vm881, %v860, -1e+30
          %v894 = vsel %vm881, %v865, -1e+30
          %v895 = vsel %vm881, %v868, -1e+30
          %v896 = vsel %vm881, %v873, -1e+30
          %v897 = vsel %vm881, %v876, -1e+30
          %898 = vmax.xlane.f32.xlu0 %v882
          %v899 = vpop.xlane.xlu0 %898
          %900 = vmax.xlane.f32.xlu0 %v883
          %v901 = vpop.xlane.xlu0 %900
          %902 = vmax.xlane.f32.xlu0 %v884
          %v903 = vpop.xlane.xlu0 %902
          %904 = vmax.xlane.f32.xlu0 %v885
          %v905 = vpop.xlane.xlu0 %904
          %906 = vmax.xlane.f32.xlu0 %v886
          %v907 = vpop.xlane.xlu0 %906
          %908 = vmax.xlane.f32.xlu0 %v887
          %v909 = vpop.xlane.xlu0 %908
          %910 = vmax.xlane.f32.xlu0 %v888
          %v911 = vpop.xlane.xlu0 %910
          %912 = vmax.xlane.f32.xlu0 %v889
          %v913 = vpop.xlane.xlu0 %912
          %914 = vmax.xlane.f32.xlu0 %v890
          %v915 = vpop.xlane.xlu0 %914
          %916 = vmax.xlane.f32.xlu0 %v891
          %v917 = vpop.xlane.xlu0 %916
          %918 = vmax.xlane.f32.xlu0 %v892
          %v919 = vpop.xlane.xlu0 %918
          %920 = vmax.xlane.f32.xlu0 %v893
          %v921 = vpop.xlane.xlu0 %920
          %922 = vmax.xlane.f32.xlu0 %v894
          %v923 = vpop.xlane.xlu0 %922
          %924 = vmax.xlane.f32.xlu0 %v895
          %v925 = vpop.xlane.xlu0 %924
          %926 = vmax.xlane.f32.xlu0 %v896
          %v927 = vpop.xlane.xlu0 %926
          %928 = vmax.xlane.f32.xlu0 %v897
          %v929 = vpop.xlane.xlu0 %928
          %v930 = vsub.f32 %v882, %v899
          %v931 = vsub.f32 %v883, %v901
          %v932 = vsub.f32 %v884, %v903
          %v933 = vsub.f32 %v885, %v905
          %v934 = vsub.f32 %v886, %v907
          %v935 = vsub.f32 %v887, %v909
          %v936 = vsub.f32 %v888, %v911
          %v937 = vsub.f32 %v889, %v913
          %v938 = vsub.f32 %v890, %v915
          %v939 = vsub.f32 %v891, %v917
          %v940 = vsub.f32 %v892, %v919
          %v941 = vsub.f32 %v893, %v921
          %v942 = vsub.f32 %v894, %v923
          %v943 = vsub.f32 %v895, %v925
          %v944 = vsub.f32 %v896, %v927
          %v945 = vsub.f32 %v897, %v929
          %v946 = vmul.f32 %v930, 1.442695
          %v947 = vpow.pop %v946
          %v948 = vmul.f32 %v931, 1.442695
          %v949 = vpow.pop %v948
          %v950 = vmul.f32 %v932, 1.442695
          %v951 = vpow.pop %v950
          %v952 = vmul.f32 %v933, 1.442695
          %v953 = vpow.pop %v952
          %v954 = vmul.f32 %v934, 1.442695
          %v955 = vpow.pop %v954
          %v956 = vmul.f32 %v935, 1.442695
          %v957 = vpow.pop %v956
          %v958 = vmul.f32 %v936, 1.442695
          %v959 = vpow.pop %v958
          %v960 = vmul.f32 %v937, 1.442695
          %v961 = vpow.pop %v960
          %v962 = vmul.f32 %v938, 1.442695
          %v963 = vpow.pop %v962
          %v964 = vmul.f32 %v939, 1.442695
          %v965 = vpow.pop %v964
          %v966 = vmul.f32 %v940, 1.442695
          %v967 = vpow.pop %v966
          %v968 = vmul.f32 %v941, 1.442695
          %v969 = vpow.pop %v968
          %v970 = vmul.f32 %v942, 1.442695
          %v971 = vpow.pop %v970
          %v972 = vmul.f32 %v943, 1.442695
          %v973 = vpow.pop %v972
          %v974 = vmul.f32 %v944, 1.442695
          %v975 = vpow.pop %v974
          %v976 = vmul.f32 %v945, 1.442695
          %v977 = vpow.pop %v976
          %978 = vadd.xlane.f32.xlu0 %v947
          %v979 = vpop.xlane.xlu0 %978
          %980 = vadd.xlane.f32.xlu0 %v949
          %v981 = vpop.xlane.xlu0 %980
          %982 = vadd.xlane.f32.xlu0 %v951
          %v983 = vpop.xlane.xlu0 %982
          %984 = vadd.xlane.f32.xlu0 %v953
          %v985 = vpop.xlane.xlu0 %984
          %986 = vadd.xlane.f32.xlu0 %v955
          %v987 = vpop.xlane.xlu0 %986
          %988 = vadd.xlane.f32.xlu0 %v957
          %v989 = vpop.xlane.xlu0 %988
          %990 = vadd.xlane.f32.xlu0 %v959
          %v991 = vpop.xlane.xlu0 %990
          %992 = vadd.xlane.f32.xlu0 %v961
          %v993 = vpop.xlane.xlu0 %992
          %994 = vadd.xlane.f32.xlu0 %v963
          %v995 = vpop.xlane.xlu0 %994
          %996 = vadd.xlane.f32.xlu0 %v965
          %v997 = vpop.xlane.xlu0 %996
          %998 = vadd.xlane.f32.xlu0 %v967
          %v999 = vpop.xlane.xlu0 %998
          %1000 = vadd.xlane.f32.xlu0 %v969
          %v1001 = vpop.xlane.xlu0 %1000
          %1002 = vadd.xlane.f32.xlu0 %v971
          %v1003 = vpop.xlane.xlu0 %1002
          %1004 = vadd.xlane.f32.xlu0 %v973
          %v1005 = vpop.xlane.xlu0 %1004
          %1006 = vadd.xlane.f32.xlu0 %v975
          %v1007 = vpop.xlane.xlu0 %1006
          %1008 = vadd.xlane.f32.xlu0 %v977
          %v1009 = vpop.xlane.xlu0 %1008
          %v1010 = vrcp.pop %v979
          %v1011 = vmul.f32 %v947, %v1010
          %v1012 = vrcp.pop %v981
          %v1013 = vmul.f32 %v949, %v1012
          %v1014 = vrcp.pop %v983
          %v1015 = vmul.f32 %v951, %v1014
          %v1016 = vrcp.pop %v985
          %v1017 = vmul.f32 %v953, %v1016
          %v1018 = vrcp.pop %v987
          %v1019 = vmul.f32 %v955, %v1018
          %v1020 = vrcp.pop %v989
          %v1021 = vmul.f32 %v957, %v1020
          %v1022 = vrcp.pop %v991
          %v1023 = vmul.f32 %v959, %v1022
          %v1024 = vrcp.pop %v993
          %v1025 = vmul.f32 %v961, %v1024
          %v1026 = vrcp.pop %v995
          %v1027 = vmul.f32 %v963, %v1026
          %v1028 = vrcp.pop %v997
          %v1029 = vmul.f32 %v965, %v1028
          %v1030 = vrcp.pop %v999
          %v1031 = vmul.f32 %v967, %v1030
          %v1032 = vrcp.pop %v1001
          %v1033 = vmul.f32 %v969, %v1032
          %v1034 = vrcp.pop %v1003
          %v1035 = vmul.f32 %v971, %v1034
          %v1036 = vrcp.pop %v1005
          %v1037 = vmul.f32 %v973, %v1036
          %v1038 = vrcp.pop %v1007
          %v1039 = vmul.f32 %v975, %v1038
          %v1040 = vrcp.pop %v1009
          %v1041 = vmul.f32 %v977, %v1040
          %1042 = vst [vmem:[%s343] sm:$0xff] %v1011
          %1043 = vst [vmem:[%s343 + $0x8] sm:$0xff] %v1013
          %1044 = vst [vmem:[%s343 + $0x10] sm:$0xff] %v1015
          %1045 = vst [vmem:[%s343 + $0x18] sm:$0xff] %v1017
          %1046 = vst [vmem:[%s343 + $0x20] sm:$0xff] %v1019
          %1047 = vst [vmem:[%s343 + $0x28] sm:$0xff] %v1021
          %1048 = vst [vmem:[%s343 + $0x30] sm:$0xff] %v1023
          %1049 = vst [vmem:[%s343 + $0x38] sm:$0xff] %v1025
          %1050 = vst [vmem:[%s343 + $0x40] sm:$0xff] %v1027
          %1051 = vst [vmem:[%s343 + $0x48] sm:$0xff] %v1029
          %1052 = vst [vmem:[%s343 + $0x50] sm:$0xff] %v1031
          %1053 = vst [vmem:[%s343 + $0x58] sm:$0xff] %v1033
          %1054 = vst [vmem:[%s343 + $0x60] sm:$0xff] %v1035
          %1055 = vst [vmem:[%s343 + $0x68] sm:$0xff] %v1037
          %1056 = vst [vmem:[%s343 + $0x70] sm:$0xff] %v1039
          %1057 = vst [vmem:[%s343 + $0x78] sm:$0xff] %v1041
        $region89: #{gcn_forward.3} parent=76 // pred_fallthru
          _
        %s1058 = smul.u32 16, %s20
        %p1059 = scmp.lt.s32.totalorder %s1058, 31
        %s1060 = scalar_select %p1059, %s1058, 31
        %s1061 = smul.addr %s1060, 8
        %s1062 = scalar_lea.vmem %s5, %s1061
        // Predicated region
        $region90: #{gcn_forward.3} parent=76 // pred_check
          %p1063 = pneg %p158
        $region91: #{gcn_forward.3} parent=76 // pred_check_branch
          %1065 = sbr.rel (%p1063) target = $region93
        $region92: #{gcn_forward.3} parent=76 // pred_region
          %s1066 = smul.u32 16, %s20
        $region93: #{gcn_forward.3} parent=76 // pred_fallthru
          _
      $region77: #{gcn_forward.3} parent=5 // pred_fallthru
        _
      %p1067 = scmp.le.s32.totalorder 2, %s11
      // Predicated region
      $region94: #{gcn_forward.3} parent=5 // pred_check
        %p1068 = pneg %p1067
      $region95: #{gcn_forward.3} parent=5 // pred_check_branch
        %1070 = sbr.rel (%p1068) target = $region97
      $region96: #{gcn_forward.3} parent=5 // pred_region
        %s1071 = ssub.s32 %s11, 2
        // Predicated region
        $region98: #{gcn_forward.3} parent=96 // pred_check
          %p1072 = pneg %p164
        $region99: #{gcn_forward.3} parent=96 // pred_check_branch
          %1074 = sbr.rel (%p1072) target = $region101
        $region100: #{gcn_forward.3} parent=96 // pred_region
          %s1075 = smul.u32 16, %s22
          %p1076 = scmp.lt.s32.totalorder %s1075, 31
          %s1077 = scalar_select %p1076, %s1075, 31
          %s1078 = smul.addr %s1077, 8
          %s1079 = scalar_lea.vmem %s5, %s1078
        $region101: #{gcn_forward.3} parent=96 // pred_fallthru
          _
      $region97: #{gcn_forward.3} parent=5 // pred_fallthru
        _
    $region6: #{gcn_forward.3} parent=1 // loop_footer
      %s15 = sadd.s32 1, %s11
    $region7: #{gcn_forward.3} parent=1 // loop_footer_branch
      %10 = sbr.rel target = $region3
    $region8: #{gcn_forward.3} parent=1 // loop_exit
      _

// kernel: gcn_forward.2
$region0: #{gcn_forward.2}
  #allocation0 [shape = 'u32[]', space=smem, size = 0x4, offset = 0x4, fixed_abs, tag = 'smem constant byte address 0x4 - core index']
  #allocation1 [shape = 'u32[144,128]{1,0:T(1,128)}', space=vmem, size = 0x12000, scoped, tag = 'internal scratch']
  #allocation2 [shape = 'f32[128,128]{1,0:T(8,128)}', space=vmem, size = 0x10000, scoped, tag = 'scratch operand']
  %s0 = inlined_call_operand.vmem [shape: bf16[256,256], index: 0, kind: input, shape index: {}]
  %s1 = inlined_call_operand.vmem [shape: f32[256,16], index: 1, kind: input, shape index: {}]
  %s2 = inlined_call_operand.vmem [shape: f32[16,128], index: 2, kind: input, shape index: {}]
  %s3 = inlined_call_operand.vmem [shape: f32[1,128], index: 3, kind: input, shape index: {}]
  %s4 = inlined_call_operand.vmem [shape: bf16[128,128], index: 4, kind: input, shape index: {}]
  %s5 = inlined_call_operand.vmem [shape: bf16[256,128], index: 5, kind: output, shape index: {}]
  %s6 = sld [smem:[#allocation0]]
  $region102: #{gcn_forward.2} parent=0
    _
  %s8 = ssub.s32 1, %s6
  %s9 = scalar_select 0, %s8, %s6
  $region1: #{gcn_forward.2} parent=0
    #allocation3 [shape = 'u8[65536]{0}', space=vmem, size = 0x10000, scoped, tag = 'input window, operand 0']
    loop: start=0, step=1, limit=6
    $region2: #{gcn_forward.2} parent=1 // loop_pre_header
      _
    $region3: #{gcn_forward.2} parent=1 // loop_header
      %s11 = sphi 0, %s15
      %p12 = scmp.ge.s32.totalorder %s11, 6
      %s18 = sphi 0, %s30
      %s19 = sphi 0, %s26
      %s20 = sphi 0, %s18
      %s21 = sphi 0, %s19
      %s22 = sphi 0, %s20
      %s23 = sphi 0, %s21
      %s35 = sphi 0, %s37
      %s38 = sphi 0, %s35
      %s39 = sphi 0, %s38
      %s55 = sphi 0, %s39
      %s59 = sphi 0, %s59
      %s61 = sphi 0, %s59
      %s62 = sphi 0, %s61
      %s76 = sphi 0, %s62
      %s80 = sphi 0, %s80
      %s82 = sphi 0, %s80
      %s83 = sphi 0, %s82
      %s97 = sphi 0, %s83
      %s101 = sphi 0, %s101
      %s103 = sphi 0, %s101
      %s104 = sphi 0, %s103
      %s118 = sphi 0, %s104
      %s122 = sphi 0, %s122
      %s124 = sphi 0, %s122
      %s125 = sphi 0, %s124
      %s139 = sphi 0, %s125
      %s145 = sphi 0, %s147
      %s148 = sphi 0, %s145
      %s149 = sphi 0, %s148
      %s165 = sphi 0, %s149
    $region4: #{gcn_forward.2} parent=1 // loop_header_branch
      %14 = sbr.rel (%p12) target = $region8
    $region5: #{gcn_forward.2} parent=1 // loop_body
      %s16 = ssub.s32 %s11, 1
      %s17 = ssub.s32 %s11, 2
      %s24 = sadd.s32 1, %s19
      %p25 = scmp.ge.s32.totalorder %s24, 2
      %s26 = scalar_select %p25, 0, %s24
      %s27 = sadd.s32 1, %s18
      %s28 = scalar_select %p25, %s27, %s18
      %p29 = scmp.ge.s32.totalorder %s28, 2
      %s30 = scalar_select %p29, 0, %s28
      %s31 = ssub.s32 %s18, %s30
      %s32 = ssub.s32 %s19, %s26
      %s33 = sor.u32 %s31, %s32
      %p34 = scmp.eq.s32.totalorder %s33, 0
      %s36 = sadd.s32 %s35, 1
      %s37 = scalar_select %p34, %s35, %s36
      %p40 = pneg %p34
      %p41 = scmp.eq.s32.totalorder %s11, 3
      %p42 = por %p40, %p41
      %p43 = scmp.ne.s32.totalorder %s35, %s38
      %p44 = scmp.eq.s32.totalorder %s11, 0
      %p45 = por %p43, %p44
      %p46 = scmp.ne.s32.totalorder %s35, %s38
      %p47 = scmp.eq.s32.totalorder %s16, 3
      %p48 = por %p46, %p47
      %p49 = scmp.ne.s32.totalorder %s38, %s39
      %p50 = scmp.eq.s32.totalorder %s16, 0
      %p51 = por %p49, %p50
      %p52 = scmp.ne.s32.totalorder %s38, %s39
      %p53 = scmp.eq.s32.totalorder %s17, 3
      %p54 = por %p52, %p53
      %p56 = scmp.ne.s32.totalorder %s39, %s55
      %p57 = scmp.eq.s32.totalorder %s17, 0
      %p58 = por %p56, %p57
      %s60 = sadd.s32 %s59, 1
      %p63 = scmp.eq.s32.totalorder %s11, 3
      %p64 = scmp.ne.s32.totalorder %s59, %s61
      %p65 = scmp.eq.s32.totalorder %s11, 0
      %p66 = por %p64, %p65
      %p67 = scmp.ne.s32.totalorder %s59, %s61
      %p68 = scmp.eq.s32.totalorder %s16, 3
      %p69 = por %p67, %p68
      %p70 = scmp.ne.s32.totalorder %s61, %s62
      %p71 = scmp.eq.s32.totalorder %s16, 0
      %p72 = por %p70, %p71
      %p73 = scmp.ne.s32.totalorder %s61, %s62
      %p74 = scmp.eq.s32.totalorder %s17, 3
      %p75 = por %p73, %p74
      %p77 = scmp.ne.s32.totalorder %s62, %s76
      %p78 = scmp.eq.s32.totalorder %s17, 0
      %p79 = por %p77, %p78
      %s81 = sadd.s32 %s80, 1
      %p84 = scmp.eq.s32.totalorder %s11, 3
      %p85 = scmp.ne.s32.totalorder %s80, %s82
      %p86 = scmp.eq.s32.totalorder %s11, 0
      %p87 = por %p85, %p86
      %p88 = scmp.ne.s32.totalorder %s80, %s82
      %p89 = scmp.eq.s32.totalorder %s16, 3
      %p90 = por %p88, %p89
      %p91 = scmp.ne.s32.totalorder %s82, %s83
      %p92 = scmp.eq.s32.totalorder %s16, 0
      %p93 = por %p91, %p92
      %p94 = scmp.ne.s32.totalorder %s82, %s83
      %p95 = scmp.eq.s32.totalorder %s17, 3
      %p96 = por %p94, %p95
      %p98 = scmp.ne.s32.totalorder %s83, %s97
      %p99 = scmp.eq.s32.totalorder %s17, 0
      %p100 = por %p98, %p99
      %s102 = sadd.s32 %s101, 1
      %p105 = scmp.eq.s32.totalorder %s11, 3
      %p106 = scmp.ne.s32.totalorder %s101, %s103
      %p107 = scmp.eq.s32.totalorder %s11, 0
      %p108 = por %p106, %p107
      %p109 = scmp.ne.s32.totalorder %s101, %s103
      %p110 = scmp.eq.s32.totalorder %s16, 3
      %p111 = por %p109, %p110
      %p112 = scmp.ne.s32.totalorder %s103, %s104
      %p113 = scmp.eq.s32.totalorder %s16, 0
      %p114 = por %p112, %p113
      %p115 = scmp.ne.s32.totalorder %s103, %s104
      %p116 = scmp.eq.s32.totalorder %s17, 3
      %p117 = por %p115, %p116
      %p119 = scmp.ne.s32.totalorder %s104, %s118
      %p120 = scmp.eq.s32.totalorder %s17, 0
      %p121 = por %p119, %p120
      %s123 = sadd.s32 %s122, 1
      %p126 = scmp.eq.s32.totalorder %s11, 3
      %p127 = scmp.ne.s32.totalorder %s122, %s124
      %p128 = scmp.eq.s32.totalorder %s11, 0
      %p129 = por %p127, %p128
      %p130 = scmp.ne.s32.totalorder %s122, %s124
      %p131 = scmp.eq.s32.totalorder %s16, 3
      %p132 = por %p130, %p131
      %p133 = scmp.ne.s32.totalorder %s124, %s125
      %p134 = scmp.eq.s32.totalorder %s16, 0
      %p135 = por %p133, %p134
      %p136 = scmp.ne.s32.totalorder %s124, %s125
      %p137 = scmp.eq.s32.totalorder %s17, 3
      %p138 = por %p136, %p137
      %p140 = scmp.ne.s32.totalorder %s125, %s139
      %p141 = scmp.eq.s32.totalorder %s17, 0
      %p142 = por %p140, %p141
      %s143 = ssub.s32 %s18, %s30
      %p144 = scmp.eq.s32.totalorder %s143, 0
      %s146 = sadd.s32 %s145, 1
      %s147 = scalar_select %p144, %s145, %s146
      %p150 = pneg %p144
      %p151 = scmp.eq.s32.totalorder %s11, 3
      %p152 = por %p150, %p151
      %p153 = scmp.ne.s32.totalorder %s145, %s148
      %p154 = scmp.eq.s32.totalorder %s11, 0
      %p155 = por %p153, %p154
      %p156 = scmp.ne.s32.totalorder %s145, %s148
      %p157 = scmp.eq.s32.totalorder %s16, 3
      %p158 = por %p156, %p157
      %p159 = scmp.ne.s32.totalorder %s148, %s149
      %p160 = scmp.eq.s32.totalorder %s16, 0
      %p161 = por %p159, %p160
      %p162 = scmp.ne.s32.totalorder %s148, %s149
      %p163 = scmp.eq.s32.totalorder %s17, 3
      %p164 = por %p162, %p163
      %p166 = scmp.ne.s32.totalorder %s149, %s165
      %p167 = scmp.eq.s32.totalorder %s17, 0
      %p168 = por %p166, %p167
      %p169 = scmp.le.s32.totalorder 1, %s11
      %p170 = scmp.lt.s32.totalorder %s11, 5
      %p171 = pnand %p169, %p170
      %p172 = pneg %p171
      // Predicated region
      $region9: #{gcn_forward.2} parent=5 // pred_check
        _
      $region10: #{gcn_forward.2} parent=5 // pred_check_branch
        %174 = sbr.rel (%p171) target = $region12
      $region11: #{gcn_forward.2} parent=5 // pred_region
        %s175 = ssub.s32 %s11, 1
        // Predicated region
        $region13: #{gcn_forward.2} parent=11 // pred_check
          %p176 = pneg %p72
        $region14: #{gcn_forward.2} parent=11 // pred_check_branch
          %178 = sbr.rel (%p176) target = $region16
        $region15: #{gcn_forward.2} parent=11 // pred_region
          _
        $region16: #{gcn_forward.2} parent=11 // pred_fallthru
          _
        // Predicated region
        $region17: #{gcn_forward.2} parent=11 // pred_check
          %p179 = pneg %p93
        $region18: #{gcn_forward.2} parent=11 // pred_check_branch
          %181 = sbr.rel (%p179) target = $region20
        $region19: #{gcn_forward.2} parent=11 // pred_region
          _
        $region20: #{gcn_forward.2} parent=11 // pred_fallthru
          _
        // Predicated region
        $region21: #{gcn_forward.2} parent=11 // pred_check
          %p182 = pneg %p114
        $region22: #{gcn_forward.2} parent=11 // pred_check_branch
          %184 = sbr.rel (%p182) target = $region24
        $region23: #{gcn_forward.2} parent=11 // pred_region
          _
        $region24: #{gcn_forward.2} parent=11 // pred_fallthru
          _
        // Predicated region
        $region25: #{gcn_forward.2} parent=11 // pred_check
          %p185 = pneg %p135
        $region26: #{gcn_forward.2} parent=11 // pred_check_branch
          %187 = sbr.rel (%p185) target = $region28
        $region27: #{gcn_forward.2} parent=11 // pred_region
          _
        $region28: #{gcn_forward.2} parent=11 // pred_fallthru
          _
      $region12: #{gcn_forward.2} parent=5 // pred_fallthru
        _
      %p188 = scmp.lt.s32.totalorder %s11, 4
      // Predicated region
      $region29: #{gcn_forward.2} parent=5 // pred_check
        %p189 = pneg %p188
      $region30: #{gcn_forward.2} parent=5 // pred_check_branch
        %191 = sbr.rel (%p189) target = $region32
      $region31: #{gcn_forward.2} parent=5 // pred_region
        // Predicated region
        $region33: #{gcn_forward.2} parent=31 // pred_check
          %p192 = pneg %p45
        $region34: #{gcn_forward.2} parent=31 // pred_check_branch
          %194 = sbr.rel (%p192) target = $region36
        $region35: #{gcn_forward.2} parent=31 // pred_region
          %s195 = sand.u32 %s35, 1
          %s196 = sand.u32 %s35, 1
          %s197 = smul.addr %s196, 64
          %s198 = scalar_lea.vmem [#allocation3], %s197
          %s199 = smul.u32 16, %s18
          %s200 = smul.addr %s199, 2
          %s201 = sadd.s32 %s19, %s200
          %s202 = smul.addr %s201, 4
          %s203 = scalar_lea.vmem %s0, %s202
          // Predicated region
          $region37: #{gcn_forward.2} parent=35 // pred_check
            _
          $region38: #{gcn_forward.2} parent=35 // pred_check_branch
            %205 = sbr.rel (0) target = $region40
          $region39: #{gcn_forward.2} parent=35 // pred_region
            // Predicated region
            $region41: #{gcn_forward.2} parent=39 // pred_check
              _
            $region42: #{gcn_forward.2} parent=39 // pred_check_branch
              %207 = sbr.rel target = $region44
            $region43: #{gcn_forward.2} parent=39 // pred_region
              // Predicated region
              $region56: #{gcn_forward.2} parent=43 // pred_check
                _
              $region57: #{gcn_forward.2} parent=43 // pred_check_branch
                %252 = sbr.rel (0) target = $region59
              $region58: #{gcn_forward.2} parent=43 // pred_region
                loop: start=0, step=1, limit=1
                $region60: #{gcn_forward.2} parent=58 // loop_pre_header
                  _
                $region61: #{gcn_forward.2} parent=58 // loop_header
                  %s254 = sphi 0, %s258
                  %p255 = scmp.ge.s32.totalorder %s254, 1
                  %s259 = sphi %s203, %s203
                  %s260 = sphi %s198, %s198
                $region62: #{gcn_forward.2} parent=58 // loop_header_branch
                  %257 = sbr.rel (%p255) target = $region66
                $region63: #{gcn_forward.2} parent=58 // loop_body
                  _
                $region64: #{gcn_forward.2} parent=58 // loop_footer
                  %s258 = sadd.s32 1, %s254
                $region65: #{gcn_forward.2} parent=58 // loop_footer_branch
                  %253 = sbr.rel target = $region61
                $region66: #{gcn_forward.2} parent=58 // loop_exit
                  _
                loop: start=0, step=1, limit=1
                $region67: #{gcn_forward.2} parent=58 // loop_pre_header
                  _
                $region68: #{gcn_forward.2} parent=58 // loop_header
                  %s263 = sphi 0, %s267
                  %p264 = scmp.ge.s32.totalorder %s263, 1
                  %s268 = sphi %s203, %s203
                  %s269 = sphi %s198, %s198
                $region69: #{gcn_forward.2} parent=58 // loop_header_branch
                  %266 = sbr.rel (%p264) target = $region73
                $region70: #{gcn_forward.2} parent=58 // loop_body
                  %v270 = vld [vmem:[%s268] sm:$0xf]
                  %271 = vst [vmem:[%s269] sm:$0xf] %v270
                  %v272 = vld [vmem:[%s268 + $0x8] sm:$0xf]
                  %273 = vst [vmem:[%s269 + $0x4] sm:$0xf] %v272
                  %v274 = vld [vmem:[%s268 + $0x10] sm:$0xf]
                  %275 = vst [vmem:[%s269 + $0x8] sm:$0xf] %v274
                  %v276 = vld [vmem:[%s268 + $0x18] sm:$0xf]
                  %277 = vst [vmem:[%s269 + $0xc] sm:$0xf] %v276
                  %v278 = vld [vmem:[%s268 + $0x20] sm:$0xf]
                  %279 = vst [vmem:[%s269 + $0x10] sm:$0xf] %v278
                  %v280 = vld [vmem:[%s268 + $0x28] sm:$0xf]
                  %281 = vst [vmem:[%s269 + $0x14] sm:$0xf] %v280
                  %v282 = vld [vmem:[%s268 + $0x30] sm:$0xf]
                  %283 = vst [vmem:[%s269 + $0x18] sm:$0xf] %v282
                  %v284 = vld [vmem:[%s268 + $0x38] sm:$0xf]
                  %285 = vst [vmem:[%s269 + $0x1c] sm:$0xf] %v284
                  %v286 = vld [vmem:[%s268 + $0x40] sm:$0xf]
                  %287 = vst [vmem:[%s269 + $0x20] sm:$0xf] %v286
                  %v288 = vld [vmem:[%s268 + $0x48] sm:$0xf]
                  %289 = vst [vmem:[%s269 + $0x24] sm:$0xf] %v288
                  %v290 = vld [vmem:[%s268 + $0x50] sm:$0xf]
                  %291 = vst [vmem:[%s269 + $0x28] sm:$0xf] %v290
                  %v292 = vld [vmem:[%s268 + $0x58] sm:$0xf]
                  %293 = vst [vmem:[%s269 + $0x2c] sm:$0xf] %v292
                  %v294 = vld [vmem:[%s268 + $0x60] sm:$0xf]
                  %295 = vst [vmem:[%s269 + $0x30] sm:$0xf] %v294
                  %v296 = vld [vmem:[%s268 + $0x68] sm:$0xf]
                  %297 = vst [vmem:[%s269 + $0x34] sm:$0xf] %v296
                  %v298 = vld [vmem:[%s268 + $0x70] sm:$0xf]
                  %299 = vst [vmem:[%s269 + $0x38] sm:$0xf] %v298
                  %v300 = vld [vmem:[%s268 + $0x78] sm:$0xf]
                  %301 = vst [vmem:[%s269 + $0x3c] sm:$0xf] %v300
                $region71: #{gcn_forward.2} parent=58 // loop_footer
                  %s267 = sadd.s32 1, %s263
                $region72: #{gcn_forward.2} parent=58 // loop_footer_branch
                  %262 = sbr.rel target = $region68
                $region73: #{gcn_forward.2} parent=58 // loop_exit
                  _
              $region59: #{gcn_forward.2} parent=43 // pred_fallthru
                _
            $region44: #{gcn_forward.2} parent=39 // pred_fallthru
              _
            // Predicated region
            $region45: #{gcn_forward.2} parent=39 // pred_check
              _
            $region46: #{gcn_forward.2} parent=39 // pred_check_branch
              %209 = sbr.rel (0) target = $region48
            $region47: #{gcn_forward.2} parent=39 // pred_region
              loop: start=0, step=1, limit=1
              $region49: #{gcn_forward.2} parent=47 // loop_pre_header
                _
              $region50: #{gcn_forward.2} parent=47 // loop_header
                %s212 = sphi 0, %s216
                %p213 = scmp.ge.s32.totalorder %s212, 1
                %s217 = sphi %s203, %s203
                %s218 = sphi %s198, %s198
              $region51: #{gcn_forward.2} parent=47 // loop_header_branch
                %215 = sbr.rel (%p213) target = $region55
              $region52: #{gcn_forward.2} parent=47 // loop_body
                %v219 = vld [vmem:[%s217] sm:$0xf]
                %220 = vst [vmem:[%s218] sm:$0xf] %v219
                %v221 = vld [vmem:[%s217 + $0x8] sm:$0xf]
                %222 = vst [vmem:[%s218 + $0x4] sm:$0xf] %v221
                %v223 = vld [vmem:[%s217 + $0x10] sm:$0xf]
                %224 = vst [vmem:[%s218 + $0x8] sm:$0xf] %v223
                %v225 = vld [vmem:[%s217 + $0x18] sm:$0xf]
                %226 = vst [vmem:[%s218 + $0xc] sm:$0xf] %v225
                %v227 = vld [vmem:[%s217 + $0x20] sm:$0xf]
                %228 = vst [vmem:[%s218 + $0x10] sm:$0xf] %v227
                %v229 = vld [vmem:[%s217 + $0x28] sm:$0xf]
                %230 = vst [vmem:[%s218 + $0x14] sm:$0xf] %v229
                %v231 = vld [vmem:[%s217 + $0x30] sm:$0xf]
                %232 = vst [vmem:[%s218 + $0x18] sm:$0xf] %v231
                %v233 = vld [vmem:[%s217 + $0x38] sm:$0xf]
                %234 = vst [vmem:[%s218 + $0x1c] sm:$0xf] %v233
                %v235 = vld [vmem:[%s217 + $0x40] sm:$0xf]
                %236 = vst [vmem:[%s218 + $0x20] sm:$0xf] %v235
                %v237 = vld [vmem:[%s217 + $0x48] sm:$0xf]
                %238 = vst [vmem:[%s218 + $0x24] sm:$0xf] %v237
                %v239 = vld [vmem:[%s217 + $0x50] sm:$0xf]
                %240 = vst [vmem:[%s218 + $0x28] sm:$0xf] %v239
                %v241 = vld [vmem:[%s217 + $0x58] sm:$0xf]
                %242 = vst [vmem:[%s218 + $0x2c] sm:$0xf] %v241
                %v243 = vld [vmem:[%s217 + $0x60] sm:$0xf]
                %244 = vst [vmem:[%s218 + $0x30] sm:$0xf] %v243
                %v245 = vld [vmem:[%s217 + $0x68] sm:$0xf]
                %246 = vst [vmem:[%s218 + $0x34] sm:$0xf] %v245
                %v247 = vld [vmem:[%s217 + $0x70] sm:$0xf]
                %248 = vst [vmem:[%s218 + $0x38] sm:$0xf] %v247
                %v249 = vld [vmem:[%s217 + $0x78] sm:$0xf]
                %250 = vst [vmem:[%s218 + $0x3c] sm:$0xf] %v249
              $region53: #{gcn_forward.2} parent=47 // loop_footer
                %s216 = sadd.s32 1, %s212
              $region54: #{gcn_forward.2} parent=47 // loop_footer_branch
                %211 = sbr.rel target = $region50
              $region55: #{gcn_forward.2} parent=47 // loop_exit
                _
            $region48: #{gcn_forward.2} parent=39 // pred_fallthru
              _
          $region40: #{gcn_forward.2} parent=35 // pred_fallthru
            _
          %302 = vnop
        $region36: #{gcn_forward.2} parent=31 // pred_fallthru
          _
      $region32: #{gcn_forward.2} parent=5 // pred_fallthru
        _
      %p303 = scmp.le.s32.totalorder 1, %s11
      %p304 = scmp.lt.s32.totalorder %s11, 5
      %p305 = pnand %p303, %p304
      %p306 = pneg %p305
      // Predicated region
      $region74: #{gcn_forward.2} parent=5 // pred_check
        _
      $region75: #{gcn_forward.2} parent=5 // pred_check_branch
        %308 = sbr.rel (%p305) target = $region77
      $region76: #{gcn_forward.2} parent=5 // pred_region
        %s309 = ssub.s32 %s11, 1
        %s310 = sand.u32 %s38, 1
        %s311 = sand.u32 %s38, 1
        %s312 = smul.addr %s311, 64
        %s313 = scalar_lea.vmem [#allocation3], %s312
        // Predicated region
        $region78: #{gcn_forward.2} parent=76 // pred_check
          %p314 = pneg %p51
        $region79: #{gcn_forward.2} parent=76 // pred_check_branch
          %316 = sbr.rel (%p314) target = $region81
        $region80: #{gcn_forward.2} parent=76 // pred_region
          _
        $region81: #{gcn_forward.2} parent=76 // pred_fallthru
          _
        %s317 = sand.u32 %s38, 1
        %s318 = sand.u32 %s38, 1
        %s319 = smul.addr %s318, 64
        %s320 = scalar_lea.vmem [#allocation3], %s319
        %p321 = pneg %p51
        %p322 = pneg %p48
        %p323 = pneg %p72
        %p324 = pneg %p69
        %p325 = pneg %p93
        %p326 = pneg %p90
        %p327 = pneg %p114
        %p328 = pneg %p111
        %p329 = pneg %p135
        %p330 = pneg %p132
        %p331 = pneg %p161
        %p332 = pneg %p158
        %s333 = smul.u32 16, %s20
        %p334 = scmp.lt.s32.totalorder %s333, 31
        %s335 = scalar_select %p334, %s333, 31
        %s336 = smul.addr %s335, 4
        %s337 = scalar_lea.vmem %s5, %s336
        %s338 = smul.u32 16, %s20
        %s339 = smul.u32 16, %s20
        %p340 = scmp.lt.s32.totalorder %s339, 31
        %s341 = scalar_select %p340, %s339, 31
        %s342 = smul.addr %s341, 4
        %s343 = scalar_lea.vmem %s5, %s342
        %s344 = smul.u32 16, %s20
        %p346 = scmp.eq.s32.totalorder %s21, 0
        // Predicated region
        $region82: #{gcn_forward.2} parent=76 // pred_check
          %p347 = pneg %p346
        $region83: #{gcn_forward.2} parent=76 // pred_check_branch
          %349 = sbr.rel (%p347) target = $region85
        $region84: #{gcn_forward.2} parent=76 // pred_region
          %350 = vst [vmem:[#allocation2] sm:$0xff] 0.0
          %351 = vst [vmem:[#allocation2 + $0x8] sm:$0xff] 0.0
          %352 = vst [vmem:[#allocation2 + $0x10] sm:$0xff] 0.0
          %353 = vst [vmem:[#allocation2 + $0x18] sm:$0xff] 0.0
          %354 = vst [vmem:[#allocation2 + $0x20] sm:$0xff] 0.0
          %355 = vst [vmem:[#allocation2 + $0x28] sm:$0xff] 0.0
          %356 = vst [vmem:[#allocation2 + $0x30] sm:$0xff] 0.0
          %357 = vst [vmem:[#allocation2 + $0x38] sm:$0xff] 0.0
          %358 = vst [vmem:[#allocation2 + $0x40] sm:$0xff] 0.0
          %359 = vst [vmem:[#allocation2 + $0x48] sm:$0xff] 0.0
          %360 = vst [vmem:[#allocation2 + $0x50] sm:$0xff] 0.0
          %361 = vst [vmem:[#allocation2 + $0x58] sm:$0xff] 0.0
          %362 = vst [vmem:[#allocation2 + $0x60] sm:$0xff] 0.0
          %363 = vst [vmem:[#allocation2 + $0x68] sm:$0xff] 0.0
          %364 = vst [vmem:[#allocation2 + $0x70] sm:$0xff] 0.0
          %365 = vst [vmem:[#allocation2 + $0x78] sm:$0xff] 0.0
        $region85: #{gcn_forward.2} parent=76 // pred_fallthru
          _
        %s366 = smul.u32 %s21, 128
        %s367 = scalar_lea.vmem %s1, %s366
        %v368 = vld [vmem:[%s367] sm:$0xff]
        %v369 = vld [vmem:[%s367 + $0x8] sm:$0xff]
        %v370 = vld [vmem:[%s367 + $0x10] sm:$0xff]
        %v371 = vld [vmem:[%s367 + $0x18] sm:$0xff]
        %v372 = vld [vmem:[%s367 + $0x20] sm:$0xff]
        %v373 = vld [vmem:[%s367 + $0x28] sm:$0xff]
        %v374 = vld [vmem:[%s367 + $0x30] sm:$0xff]
        %v375 = vld [vmem:[%s367 + $0x38] sm:$0xff]
        %v376 = vld [vmem:[%s367 + $0x40] sm:$0xff]
        %v377 = vld [vmem:[%s367 + $0x48] sm:$0xff]
        %v378 = vld [vmem:[%s367 + $0x50] sm:$0xff]
        %v379 = vld [vmem:[%s367 + $0x58] sm:$0xff]
        %v380 = vld [vmem:[%s367 + $0x60] sm:$0xff]
        %v381 = vld [vmem:[%s367 + $0x68] sm:$0xff]
        %v382 = vld [vmem:[%s367 + $0x70] sm:$0xff]
        %v383 = vld [vmem:[%s367 + $0x78] sm:$0xff]
        %v384 = vld [vmem:[%s2] sm:$0xff]
        %v385 = vld [vmem:[%s2 + $0x8] sm:$0xff]
        %vm386 = vcmask 130048
        %v388 = vsel %vm386, %v368, 0
        %v391 = vsel %vm386, %v369, 0
        %v394 = vsel %vm386, %v370, 0
        %v397 = vsel %vm386, %v371, 0
        %v400 = vsel %vm386, %v372, 0
        %v403 = vsel %vm386, %v373, 0
        %v406 = vsel %vm386, %v374, 0
        %v409 = vsel %vm386, %v375, 0
        %v412 = vsel %vm386, %v376, 0
        %v415 = vsel %vm386, %v377, 0
        %v418 = vsel %vm386, %v378, 0
        %v421 = vsel %vm386, %v379, 0
        %v424 = vsel %vm386, %v380, 0
        %v427 = vsel %vm386, %v381, 0
        %v430 = vsel %vm386, %v382, 0
        %v433 = vsel %vm386, %v383, 0
        %435 = vmatprep.subr.mxu0 0.0
        %436 = vmatpush1.msra.mxu0 %v384
        %437 = vmatprep.subr.mxu0 0.0
        %438 = vmatpush1.msra.mxu0 %v385
        %439 = vmatprep.subr.mxu0 0.0
        %440 = vmatpush1.msra.mxu0 0.0
        %441 = vmatprep.subr.mxu0 0.0
        %442 = vmatpush1.msra.mxu0 0.0
        %443 = vmatprep.subr.mxu0 0.0
        %444 = vmatpush1.msra.mxu0 0.0
        %445 = vmatprep.subr.mxu0 0.0
        %446 = vmatpush1.msra.mxu0 0.0
        %447 = vmatprep.subr.mxu0 0.0
        %448 = vmatpush1.msra.mxu0 0.0
        %449 = vmatprep.subr.mxu0 0.0
        %450 = vmatpush1.msra.mxu0 0.0
        %451 = vmatprep.subr.mxu0 0.0
        %452 = vmatpush1.msra.mxu0 0.0
        %453 = vmatprep.subr.mxu0 0.0
        %454 = vmatpush1.msra.mxu0 0.0
        %455 = vmatprep.subr.mxu0 0.0
        %456 = vmatpush1.msra.mxu0 0.0
        %457 = vmatprep.subr.mxu0 0.0
        %458 = vmatpush1.msra.mxu0 0.0
        %459 = vmatprep.subr.mxu0 0.0
        %460 = vmatpush1.msra.mxu0 0.0
        %461 = vmatprep.subr.mxu0 0.0
        %462 = vmatpush1.msra.mxu0 0.0
        %463 = vmatprep.subr.mxu0 0.0
        %464 = vmatpush1.msra.mxu0 0.0
        %465 = vmatprep.subr.mxu0 0.0
        %466 = vmatpush1.msra.mxu0 0.0
        %467 = vmatprep.subr.mxu0 0.0
        %468 = vmatpush1.msra.mxu0 0.0
        %469 = vmatprep.subr.mxu0 0.0
        %470 = vmatpush1.msra.mxu0 0.0
        %471 = vmatprep.subr.mxu0 0.0
        %472 = vmatpush1.msra.mxu0 0.0
        %473 = vmatprep.subr.mxu0 0.0
        %474 = vmatpush1.msra.mxu0 0.0
        %475 = vmatprep.subr.mxu0 0.0
        %476 = vmatpush1.msra.mxu0 0.0
        %477 = vmatprep.subr.mxu0 0.0
        %478 = vmatpush1.msra.mxu0 0.0
        %479 = vmatprep.subr.mxu0 0.0
        %480 = vmatpush1.msra.mxu0 0.0
        %481 = vmatprep.subr.mxu0 0.0
        %482 = vmatpush1.msra.mxu0 0.0
        %483 = vmatprep.subr.mxu0 0.0
        %484 = vmatpush1.msra.mxu0 0.0
        %485 = vmatprep.subr.mxu0 0.0
        %486 = vmatpush1.msra.mxu0 0.0
        %487 = vmatprep.subr.mxu0 0.0
        %488 = vmatpush1.msra.mxu0 0.0
        %489 = vmatprep.subr.mxu0 0.0
        %490 = vmatpush1.msra.mxu0 0.0
        %491 = vmatprep.subr.mxu0 0.0
        %492 = vmatpush1.msra.mxu0 0.0
        %493 = vmatprep.subr.mxu0 0.0
        %494 = vmatpush1.msra.mxu0 0.0
        %495 = vmatprep.subr.mxu0 0.0
        %496 = vmatpush1.msra.mxu0 0.0
        %497 = vmatprep.subr.mxu0 0.0
        %498 = vmatpush1.msra.mxu0 0.0
        %499 = vmatprep.mubr.f32.mxu0 0.0
        %500 = vmatmul.mubr.f32.gmra.mrb[0].mxu0 %v388
        %v501 = vpop.f32.mrb[0].mxu0
        %v502 = vadd.f32 0.0, %v501
        %v503 = vpop.f32.mrb[0].mxu0
        %504 = vmatprep.mubr.f32.mxu0 0.0
        %505 = vmatmul.mubr.f32.gmra.mrb[0].mxu0 %v391
        %v506 = vpop.f32.mrb[0].mxu0
        %v507 = vadd.f32 0.0, %v506
        %v508 = vpop.f32.mrb[0].mxu0
        %509 = vmatprep.mubr.f32.mxu0 0.0
        %510 = vmatmul.mubr.f32.gmra.mrb[0].mxu0 %v394
        %v511 = vpop.f32.mrb[0].mxu0
        %v512 = vadd.f32 0.0, %v511
        %v513 = vpop.f32.mrb[0].mxu0
        %514 = vmatprep.mubr.f32.mxu0 0.0
        %515 = vmatmul.mubr.f32.gmra.mrb[0].mxu0 %v397
        %v516 = vpop.f32.mrb[0].mxu0
        %v517 = vadd.f32 0.0, %v516
        %v518 = vpop.f32.mrb[0].mxu0
        %519 = vmatprep.mubr.f32.mxu0 0.0
        %520 = vmatmul.mubr.f32.gmra.mrb[0].mxu0 %v400
        %v521 = vpop.f32.mrb[0].mxu0
        %v522 = vadd.f32 0.0, %v521
        %v523 = vpop.f32.mrb[0].mxu0
        %524 = vmatprep.mubr.f32.mxu0 0.0
        %525 = vmatmul.mubr.f32.gmra.mrb[0].mxu0 %v403
        %v526 = vpop.f32.mrb[0].mxu0
        %v527 = vadd.f32 0.0, %v526
        %v528 = vpop.f32.mrb[0].mxu0
        %529 = vmatprep.mubr.f32.mxu0 0.0
        %530 = vmatmul.mubr.f32.gmra.mrb[0].mxu0 %v406
        %v531 = vpop.f32.mrb[0].mxu0
        %v532 = vadd.f32 0.0, %v531
        %v533 = vpop.f32.mrb[0].mxu0
        %534 = vmatprep.mubr.f32.mxu0 0.0
        %535 = vmatmul.mubr.f32.gmra.mrb[0].mxu0 %v409
        %v536 = vpop.f32.mrb[0].mxu0
        %v537 = vadd.f32 0.0, %v536
        %v538 = vpop.f32.mrb[0].mxu0
        %539 = vmatprep.mubr.f32.mxu0 0.0
        %540 = vmatmul.mubr.f32.gmra.mrb[0].mxu0 %v412
        %v541 = vpop.f32.mrb[0].mxu0
        %v542 = vadd.f32 0.0, %v541
        %v543 = vpop.f32.mrb[0].mxu0
        %544 = vmatprep.mubr.f32.mxu0 0.0
        %545 = vmatmul.mubr.f32.gmra.mrb[0].mxu0 %v415
        %v546 = vpop.f32.mrb[0].mxu0
        %v547 = vadd.f32 0.0, %v546
        %v548 = vpop.f32.mrb[0].mxu0
        %549 = vmatprep.mubr.f32.mxu0 0.0
        %550 = vmatmul.mubr.f32.gmra.mrb[0].mxu0 %v418
        %v551 = vpop.f32.mrb[0].mxu0
        %v552 = vadd.f32 0.0, %v551
        %v553 = vpop.f32.mrb[0].mxu0
        %554 = vmatprep.mubr.f32.mxu0 0.0
        %555 = vmatmul.mubr.f32.gmra.mrb[0].mxu0 %v421
        %v556 = vpop.f32.mrb[0].mxu0
        %v557 = vadd.f32 0.0, %v556
        %v558 = vpop.f32.mrb[0].mxu0
        %559 = vmatprep.mubr.f32.mxu0 0.0
        %560 = vmatmul.mubr.f32.gmra.mrb[0].mxu0 %v424
        %v561 = vpop.f32.mrb[0].mxu0
        %v562 = vadd.f32 0.0, %v561
        %v563 = vpop.f32.mrb[0].mxu0
        %564 = vmatprep.mubr.f32.mxu0 0.0
        %565 = vmatmul.mubr.f32.gmra.mrb[0].mxu0 %v427
        %v566 = vpop.f32.mrb[0].mxu0
        %v567 = vadd.f32 0.0, %v566
        %v568 = vpop.f32.mrb[0].mxu0
        %569 = vmatprep.mubr.f32.mxu0 0.0
        %570 = vmatmul.mubr.f32.gmra.mrb[0].mxu0 %v430
        %v571 = vpop.f32.mrb[0].mxu0
        %v572 = vadd.f32 0.0, %v571
        %v573 = vpop.f32.mrb[0].mxu0
        %574 = vmatprep.mubr.f32.mxu0 0.0
        %575 = vmatmul.mubr.f32.gmra.mrb[0].mxu0 %v433
        %v576 = vpop.f32.mrb[0].mxu0
        %v577 = vadd.f32 0.0, %v576
        %v578 = vpop.f32.mrb[0].mxu0
        %579 = vdwg.mxu0
        %v580 = vpack.c.bf16 %v507, %v502
        %v581 = vpack.c.bf16 %v517, %v512
        %v582 = vpack.c.bf16 %v527, %v522
        %v583 = vpack.c.bf16 %v537, %v532
        %v584 = vpack.c.bf16 %v547, %v542
        %v585 = vpack.c.bf16 %v557, %v552
        %v586 = vpack.c.bf16 %v567, %v562
        %v587 = vpack.c.bf16 %v577, %v572
        %v588 = vld [vmem:[#allocation2] sm:$0xff]
        %v589 = vld [vmem:[#allocation2 + $0x8] sm:$0xff]
        %v590 = vld [vmem:[#allocation2 + $0x10] sm:$0xff]
        %v591 = vld [vmem:[#allocation2 + $0x18] sm:$0xff]
        %v592 = vld [vmem:[#allocation2 + $0x20] sm:$0xff]
        %v593 = vld [vmem:[#allocation2 + $0x28] sm:$0xff]
        %v594 = vld [vmem:[#allocation2 + $0x30] sm:$0xff]
        %v595 = vld [vmem:[#allocation2 + $0x38] sm:$0xff]
        %v596 = vld [vmem:[#allocation2 + $0x40] sm:$0xff]
        %v597 = vld [vmem:[#allocation2 + $0x48] sm:$0xff]
        %v598 = vld [vmem:[#allocation2 + $0x50] sm:$0xff]
        %v599 = vld [vmem:[#allocation2 + $0x58] sm:$0xff]
        %v600 = vld [vmem:[#allocation2 + $0x60] sm:$0xff]
        %v601 = vld [vmem:[#allocation2 + $0x68] sm:$0xff]
        %v602 = vld [vmem:[#allocation2 + $0x70] sm:$0xff]
        %v603 = vld [vmem:[#allocation2 + $0x78] sm:$0xff]
        %v604 = vld [vmem:[%s313] sm:$0xf]
        %v605 = vld [vmem:[%s313 + $0x4] sm:$0xf]
        %v606 = vld [vmem:[%s313 + $0x8] sm:$0xf]
        %v607 = vld [vmem:[%s313 + $0xc] sm:$0xf]
        %v608 = vld [vmem:[%s313 + $0x10] sm:$0xf]
        %v609 = vld [vmem:[%s313 + $0x14] sm:$0xf]
        %v610 = vld [vmem:[%s313 + $0x18] sm:$0xf]
        %v611 = vld [vmem:[%s313 + $0x1c] sm:$0xf]
        %v612 = vld [vmem:[%s313 + $0x20] sm:$0xf]
        %v613 = vld [vmem:[%s313 + $0x24] sm:$0xf]
        %v614 = vld [vmem:[%s313 + $0x28] sm:$0xf]
        %v615 = vld [vmem:[%s313 + $0x2c] sm:$0xf]
        %v616 = vld [vmem:[%s313 + $0x30] sm:$0xf]
        %v617 = vld [vmem:[%s313 + $0x34] sm:$0xf]
        %v618 = vld [vmem:[%s313 + $0x38] sm:$0xf]
        %v619 = vld [vmem:[%s313 + $0x3c] sm:$0xf]
        %v636 = vunpack.c.l.b16 %v604
        %v637 = vunpack.c.l.b16 %v605
        %v638 = vunpack.c.l.b16 %v606
        %v639 = vunpack.c.l.b16 %v607
        %v640 = vunpack.c.l.b16 %v608
        %v641 = vunpack.c.l.b16 %v609
        %v642 = vunpack.c.l.b16 %v610
        %v643 = vunpack.c.l.b16 %v611
        %v644 = vunpack.c.l.b16 %v612
        %v645 = vunpack.c.l.b16 %v613
        %v646 = vunpack.c.l.b16 %v614
        %v647 = vunpack.c.l.b16 %v615
        %v648 = vunpack.c.l.b16 %v616
        %v649 = vunpack.c.l.b16 %v617
        %v650 = vunpack.c.l.b16 %v618
        %v651 = vunpack.c.l.b16 %v619
        %v652 = vpack.c.b16 %v637, %v636
        %v653 = vpack.c.b16 %v639, %v638
        %v654 = vpack.c.b16 %v641, %v640
        %v655 = vpack.c.b16 %v643, %v642
        %v656 = vpack.c.b16 %v645, %v644
        %v657 = vpack.c.b16 %v647, %v646
        %v658 = vpack.c.b16 %v649, %v648
        %v659 = vpack.c.b16 %v651, %v650
        %668 = vmatprep.subr.bf16.mxu0 0
        %669 = vmatpush1.bf16.msra.mxu0 %v580
        %670 = vmatprep.subr.bf16.mxu0 0
        %671 = vmatpush1.bf16.msra.mxu0 %v581
        %672 = vmatprep.subr.bf16.mxu0 0
        %673 = vmatpush1.bf16.msra.mxu0 %v582
        %674 = vmatprep.subr.bf16.mxu0 0
        %675 = vmatpush1.bf16.msra.mxu0 %v583
        %676 = vmatprep.subr.bf16.mxu0 0
        %677 = vmatpush1.bf16.msra.mxu0 %v584
        %678 = vmatprep.subr.bf16.mxu0 0
        %679 = vmatpush1.bf16.msra.mxu0 %v585
        %680 = vmatprep.subr.bf16.mxu0 0
        %681 = vmatpush1.bf16.msra.mxu0 %v586
        %682 = vmatprep.subr.bf16.mxu0 0
        %683 = vmatpush1.bf16.msra.mxu0 %v587
        %684 = vmatprep.subr.bf16.mxu0 0
        %685 = vmatpush1.bf16.msra.mxu0 0
        %686 = vmatprep.subr.bf16.mxu0 0
        %687 = vmatpush1.bf16.msra.mxu0 0
        %688 = vmatprep.subr.bf16.mxu0 0
        %689 = vmatpush1.bf16.msra.mxu0 0
        %690 = vmatprep.subr.bf16.mxu0 0
        %691 = vmatpush1.bf16.msra.mxu0 0
        %692 = vmatprep.subr.bf16.mxu0 0
        %693 = vmatpush1.bf16.msra.mxu0 0
        %694 = vmatprep.subr.bf16.mxu0 0
        %695 = vmatpush1.bf16.msra.mxu0 0
        %696 = vmatprep.subr.bf16.mxu0 0
        %697 = vmatpush1.bf16.msra.mxu0 0
        %698 = vmatprep.subr.bf16.mxu0 0
        %699 = vmatpush1.bf16.msra.mxu0 0
        %700 = vmatprep.mubr.bf16.mxu0 0
        %701 = vmatmul.mubr.bf16.gmra.mrb[0].mxu0 %v652
        %v702 = vpop.f32.mrb[0].mxu0
        %v703 = vadd.f32 0.0, %v702
        %v704 = vpop.f32.mrb[0].mxu0
        %v705 = vpop.f32.mrb[0].mxu0
        %v706 = vadd.f32 0.0, %v705
        %v707 = vpop.f32.mrb[0].mxu0
        %708 = vmatprep.mubr.bf16.mxu0 0
        %709 = vmatmul.mubr.bf16.gmra.mrb[0].mxu0 %v653
        %v710 = vpop.f32.mrb[0].mxu0
        %v711 = vadd.f32 0.0, %v710
        %v712 = vpop.f32.mrb[0].mxu0
        %v713 = vpop.f32.mrb[0].mxu0
        %v714 = vadd.f32 0.0, %v713
        %v715 = vpop.f32.mrb[0].mxu0
        %716 = vmatprep.mubr.bf16.mxu0 0
        %717 = vmatmul.mubr.bf16.gmra.mrb[0].mxu0 %v654
        %v718 = vpop.f32.mrb[0].mxu0
        %v719 = vadd.f32 0.0, %v718
        %v720 = vpop.f32.mrb[0].mxu0
        %v721 = vpop.f32.mrb[0].mxu0
        %v722 = vadd.f32 0.0, %v721
        %v723 = vpop.f32.mrb[0].mxu0
        %724 = vmatprep.mubr.bf16.mxu0 0
        %725 = vmatmul.mubr.bf16.gmra.mrb[0].mxu0 %v655
        %v726 = vpop.f32.mrb[0].mxu0
        %v727 = vadd.f32 0.0, %v726
        %v728 = vpop.f32.mrb[0].mxu0
        %v729 = vpop.f32.mrb[0].mxu0
        %v730 = vadd.f32 0.0, %v729
        %v731 = vpop.f32.mrb[0].mxu0
        %732 = vmatprep.mubr.bf16.mxu0 0
        %733 = vmatmul.mubr.bf16.gmra.mrb[0].mxu0 %v656
        %v734 = vpop.f32.mrb[0].mxu0
        %v735 = vadd.f32 0.0, %v734
        %v736 = vpop.f32.mrb[0].mxu0
        %v737 = vpop.f32.mrb[0].mxu0
        %v738 = vadd.f32 0.0, %v737
        %v739 = vpop.f32.mrb[0].mxu0
        %740 = vmatprep.mubr.bf16.mxu0 0
        %741 = vmatmul.mubr.bf16.gmra.mrb[0].mxu0 %v657
        %v742 = vpop.f32.mrb[0].mxu0
        %v743 = vadd.f32 0.0, %v742
        %v744 = vpop.f32.mrb[0].mxu0
        %v745 = vpop.f32.mrb[0].mxu0
        %v746 = vadd.f32 0.0, %v745
        %v747 = vpop.f32.mrb[0].mxu0
        %748 = vmatprep.mubr.bf16.mxu0 0
        %749 = vmatmul.mubr.bf16.gmra.mrb[0].mxu0 %v658
        %v750 = vpop.f32.mrb[0].mxu0
        %v751 = vadd.f32 0.0, %v750
        %v752 = vpop.f32.mrb[0].mxu0
        %v753 = vpop.f32.mrb[0].mxu0
        %v754 = vadd.f32 0.0, %v753
        %v755 = vpop.f32.mrb[0].mxu0
        %756 = vmatprep.mubr.bf16.mxu0 0
        %757 = vmatmul.mubr.bf16.gmra.mrb[0].mxu0 %v659
        %v758 = vpop.f32.mrb[0].mxu0
        %v759 = vadd.f32 0.0, %v758
        %v760 = vpop.f32.mrb[0].mxu0
        %v761 = vpop.f32.mrb[0].mxu0
        %v762 = vadd.f32 0.0, %v761
        %v763 = vpop.f32.mrb[0].mxu0
        %764 = vdwg.mxu0
        %v765 = vadd.f32 %v588, %v703
        %v766 = vadd.f32 %v589, %v706
        %v767 = vadd.f32 %v590, %v711
        %v768 = vadd.f32 %v591, %v714
        %v769 = vadd.f32 %v592, %v719
        %v770 = vadd.f32 %v593, %v722
        %v771 = vadd.f32 %v594, %v727
        %v772 = vadd.f32 %v595, %v730
        %v773 = vadd.f32 %v596, %v735
        %v774 = vadd.f32 %v597, %v738
        %v775 = vadd.f32 %v598, %v743
        %v776 = vadd.f32 %v599, %v746
        %v777 = vadd.f32 %v600, %v751
        %v778 = vadd.f32 %v601, %v754
        %v779 = vadd.f32 %v602, %v759
        %v780 = vadd.f32 %v603, %v762
        %781 = vst [vmem:[#allocation2] sm:$0xff] %v765
        %782 = vst [vmem:[#allocation2 + $0x8] sm:$0xff] %v766
        %783 = vst [vmem:[#allocation2 + $0x10] sm:$0xff] %v767
        %784 = vst [vmem:[#allocation2 + $0x18] sm:$0xff] %v768
        %785 = vst [vmem:[#allocation2 + $0x20] sm:$0xff] %v769
        %786 = vst [vmem:[#allocation2 + $0x28] sm:$0xff] %v770
        %787 = vst [vmem:[#allocation2 + $0x30] sm:$0xff] %v771
        %788 = vst [vmem:[#allocation2 + $0x38] sm:$0xff] %v772
        %789 = vst [vmem:[#allocation2 + $0x40] sm:$0xff] %v773
        %790 = vst [vmem:[#allocation2 + $0x48] sm:$0xff] %v774
        %791 = vst [vmem:[#allocation2 + $0x50] sm:$0xff] %v775
        %792 = vst [vmem:[#allocation2 + $0x58] sm:$0xff] %v776
        %793 = vst [vmem:[#allocation2 + $0x60] sm:$0xff] %v777
        %794 = vst [vmem:[#allocation2 + $0x68] sm:$0xff] %v778
        %795 = vst [vmem:[#allocation2 + $0x70] sm:$0xff] %v779
        %796 = vst [vmem:[#allocation2 + $0x78] sm:$0xff] %v780
        %p797 = scmp.eq.s32.totalorder %s21, 1
        // Predicated region
        $region86: #{gcn_forward.2} parent=76 // pred_check
          %p798 = pneg %p797
        $region87: #{gcn_forward.2} parent=76 // pred_check_branch
          %800 = sbr.rel (%p798) target = $region89
        $region88: #{gcn_forward.2} parent=76 // pred_region
          %v801 = vld [vmem:[#allocation2] sm:$0xff]
          %v802 = vld [vmem:[#allocation2 + $0x8] sm:$0xff]
          %v803 = vld [vmem:[#allocation2 + $0x10] sm:$0xff]
          %v804 = vld [vmem:[#allocation2 + $0x18] sm:$0xff]
          %v805 = vld [vmem:[#allocation2 + $0x20] sm:$0xff]
          %v806 = vld [vmem:[#allocation2 + $0x28] sm:$0xff]
          %v807 = vld [vmem:[#allocation2 + $0x30] sm:$0xff]
          %v808 = vld [vmem:[#allocation2 + $0x38] sm:$0xff]
          %v809 = vld [vmem:[#allocation2 + $0x40] sm:$0xff]
          %v810 = vld [vmem:[#allocation2 + $0x48] sm:$0xff]
          %v811 = vld [vmem:[#allocation2 + $0x50] sm:$0xff]
          %v812 = vld [vmem:[#allocation2 + $0x58] sm:$0xff]
          %v813 = vld [vmem:[#allocation2 + $0x60] sm:$0xff]
          %v814 = vld [vmem:[#allocation2 + $0x68] sm:$0xff]
          %v815 = vld [vmem:[#allocation2 + $0x70] sm:$0xff]
          %v816 = vld [vmem:[#allocation2 + $0x78] sm:$0xff]
          %v817 = vld [vmem:[%s3] sm:$0x1]
          %v819 = vlaneseq
          %v820 = vshrl.u32 %v819, 7
          %v821 = vsub.s32 0, %v820
          %v822 = vrot.slane %v817, %v821
          %v824 = vadd.f32 %v801, %v822
          %v825 = vadd.f32 %v802, %v822
          %v826 = vadd.f32 %v803, %v822
          %v827 = vadd.f32 %v804, %v822
          %v828 = vadd.f32 %v805, %v822
          %v829 = vadd.f32 %v806, %v822
          %v830 = vadd.f32 %v807, %v822
          %v831 = vadd.f32 %v808, %v822
          %v832 = vadd.f32 %v809, %v822
          %v833 = vadd.f32 %v810, %v822
          %v834 = vadd.f32 %v811, %v822
          %v835 = vadd.f32 %v812, %v822
          %v836 = vadd.f32 %v813, %v822
          %v837 = vadd.f32 %v814, %v822
          %v838 = vadd.f32 %v815, %v822
          %v839 = vadd.f32 %v816, %v822
          %v840 = vmax.f32 %v824, 0.0
          %v841 = vmax.f32 %v825, 0.0
          %v842 = vmax.f32 %v826, 0.0
          %v843 = vmax.f32 %v827, 0.0
          %v844 = vmax.f32 %v828, 0.0
          %v845 = vmax.f32 %v829, 0.0
          %v846 = vmax.f32 %v830, 0.0
          %v847 = vmax.f32 %v831, 0.0
          %v848 = vmax.f32 %v832, 0.0
          %v849 = vmax.f32 %v833, 0.0
          %v850 = vmax.f32 %v834, 0.0
          %v851 = vmax.f32 %v835, 0.0
          %v852 = vmax.f32 %v836, 0.0
          %v853 = vmax.f32 %v837, 0.0
          %v854 = vmax.f32 %v838, 0.0
          %v855 = vmax.f32 %v839, 0.0
          %v856 = vpack.c.bf16 %v841, %v840
          %v857 = vpack.c.bf16 %v843, %v842
          %v858 = vpack.c.bf16 %v845, %v844
          %v859 = vpack.c.bf16 %v847, %v846
          %v860 = vpack.c.bf16 %v849, %v848
          %v861 = vpack.c.bf16 %v851, %v850
          %v862 = vpack.c.bf16 %v853, %v852
          %v863 = vpack.c.bf16 %v855, %v854
          %v864 = vld [vmem:[%s4] sm:$0xf]
          %v865 = vld [vmem:[%s4 + $0x4] sm:$0xf]
          %v866 = vld [vmem:[%s4 + $0x8] sm:$0xf]
          %v867 = vld [vmem:[%s4 + $0xc] sm:$0xf]
          %v868 = vld [vmem:[%s4 + $0x10] sm:$0xf]
          %v869 = vld [vmem:[%s4 + $0x14] sm:$0xf]
          %v870 = vld [vmem:[%s4 + $0x18] sm:$0xf]
          %v871 = vld [vmem:[%s4 + $0x1c] sm:$0xf]
          %v872 = vld [vmem:[%s4 + $0x20] sm:$0xf]
          %v873 = vld [vmem:[%s4 + $0x24] sm:$0xf]
          %v874 = vld [vmem:[%s4 + $0x28] sm:$0xf]
          %v875 = vld [vmem:[%s4 + $0x2c] sm:$0xf]
          %v876 = vld [vmem:[%s4 + $0x30] sm:$0xf]
          %v877 = vld [vmem:[%s4 + $0x34] sm:$0xf]
          %v878 = vld [vmem:[%s4 + $0x38] sm:$0xf]
          %v879 = vld [vmem:[%s4 + $0x3c] sm:$0xf]
          %v896 = vunpack.c.l.b16 %v864
          %v897 = vunpack.c.l.b16 %v865
          %v898 = vunpack.c.l.b16 %v866
          %v899 = vunpack.c.l.b16 %v867
          %v900 = vunpack.c.l.b16 %v868
          %v901 = vunpack.c.l.b16 %v869
          %v902 = vunpack.c.l.b16 %v870
          %v903 = vunpack.c.l.b16 %v871
          %v904 = vunpack.c.l.b16 %v872
          %v905 = vunpack.c.l.b16 %v873
          %v906 = vunpack.c.l.b16 %v874
          %v907 = vunpack.c.l.b16 %v875
          %v908 = vunpack.c.l.b16 %v876
          %v909 = vunpack.c.l.b16 %v877
          %v910 = vunpack.c.l.b16 %v878
          %v911 = vunpack.c.l.b16 %v879
          %v912 = vpack.c.b16 %v897, %v896
          %v913 = vpack.c.b16 %v899, %v898
          %v914 = vpack.c.b16 %v901, %v900
          %v915 = vpack.c.b16 %v903, %v902
          %v916 = vpack.c.b16 %v905, %v904
          %v917 = vpack.c.b16 %v907, %v906
          %v918 = vpack.c.b16 %v909, %v908
          %v919 = vpack.c.b16 %v911, %v910
          %928 = vmatprep.subr.bf16.mxu0 0
          %929 = vmatpush1.bf16.msra.mxu0 %v912
          %930 = vmatprep.subr.bf16.mxu0 0
          %931 = vmatpush1.bf16.msra.mxu0 %v913
          %932 = vmatprep.subr.bf16.mxu0 0
          %933 = vmatpush1.bf16.msra.mxu0 %v914
          %934 = vmatprep.subr.bf16.mxu0 0
          %935 = vmatpush1.bf16.msra.mxu0 %v915
          %936 = vmatprep.subr.bf16.mxu0 0
          %937 = vmatpush1.bf16.msra.mxu0 %v916
          %938 = vmatprep.subr.bf16.mxu0 0
          %939 = vmatpush1.bf16.msra.mxu0 %v917
          %940 = vmatprep.subr.bf16.mxu0 0
          %941 = vmatpush1.bf16.msra.mxu0 %v918
          %942 = vmatprep.subr.bf16.mxu0 0
          %943 = vmatpush1.bf16.msra.mxu0 %v919
          %944 = vmatprep.subr.bf16.mxu0 0
          %945 = vmatpush1.bf16.msra.mxu0 0
          %946 = vmatprep.subr.bf16.mxu0 0
          %947 = vmatpush1.bf16.msra.mxu0 0
          %948 = vmatprep.subr.bf16.mxu0 0
          %949 = vmatpush1.bf16.msra.mxu0 0
          %950 = vmatprep.subr.bf16.mxu0 0
          %951 = vmatpush1.bf16.msra.mxu0 0
          %952 = vmatprep.subr.bf16.mxu0 0
          %953 = vmatpush1.bf16.msra.mxu0 0
          %954 = vmatprep.subr.bf16.mxu0 0
          %955 = vmatpush1.bf16.msra.mxu0 0
          %956 = vmatprep.subr.bf16.mxu0 0
          %957 = vmatpush1.bf16.msra.mxu0 0
          %958 = vmatprep.subr.bf16.mxu0 0
          %959 = vmatpush1.bf16.msra.mxu0 0
          %960 = vmatprep.mubr.bf16.mxu0 0
          %961 = vmatmul.mubr.bf16.gmra.mrb[0].mxu0 %v856
          %v962 = vpop.f32.mrb[0].mxu0
          %v963 = vadd.f32 0.0, %v962
          %v964 = vpop.f32.mrb[0].mxu0
          %v965 = vpop.f32.mrb[0].mxu0
          %v966 = vadd.f32 0.0, %v965
          %v967 = vpop.f32.mrb[0].mxu0
          %968 = vmatprep.mubr.bf16.mxu0 0
          %969 = vmatmul.mubr.bf16.gmra.mrb[0].mxu0 %v857
          %v970 = vpop.f32.mrb[0].mxu0
          %v971 = vadd.f32 0.0, %v970
          %v972 = vpop.f32.mrb[0].mxu0
          %v973 = vpop.f32.mrb[0].mxu0
          %v974 = vadd.f32 0.0, %v973
          %v975 = vpop.f32.mrb[0].mxu0
          %976 = vmatprep.mubr.bf16.mxu0 0
          %977 = vmatmul.mubr.bf16.gmra.mrb[0].mxu0 %v858
          %v978 = vpop.f32.mrb[0].mxu0
          %v979 = vadd.f32 0.0, %v978
          %v980 = vpop.f32.mrb[0].mxu0
          %v981 = vpop.f32.mrb[0].mxu0
          %v982 = vadd.f32 0.0, %v981
          %v983 = vpop.f32.mrb[0].mxu0
          %984 = vmatprep.mubr.bf16.mxu0 0
          %985 = vmatmul.mubr.bf16.gmra.mrb[0].mxu0 %v859
          %v986 = vpop.f32.mrb[0].mxu0
          %v987 = vadd.f32 0.0, %v986
          %v988 = vpop.f32.mrb[0].mxu0
          %v989 = vpop.f32.mrb[0].mxu0
          %v990 = vadd.f32 0.0, %v989
          %v991 = vpop.f32.mrb[0].mxu0
          %992 = vmatprep.mubr.bf16.mxu0 0
          %993 = vmatmul.mubr.bf16.gmra.mrb[0].mxu0 %v860
          %v994 = vpop.f32.mrb[0].mxu0
          %v995 = vadd.f32 0.0, %v994
          %v996 = vpop.f32.mrb[0].mxu0
          %v997 = vpop.f32.mrb[0].mxu0
          %v998 = vadd.f32 0.0, %v997
          %v999 = vpop.f32.mrb[0].mxu0
          %1000 = vmatprep.mubr.bf16.mxu0 0
          %1001 = vmatmul.mubr.bf16.gmra.mrb[0].mxu0 %v861
          %v1002 = vpop.f32.mrb[0].mxu0
          %v1003 = vadd.f32 0.0, %v1002
          %v1004 = vpop.f32.mrb[0].mxu0
          %v1005 = vpop.f32.mrb[0].mxu0
          %v1006 = vadd.f32 0.0, %v1005
          %v1007 = vpop.f32.mrb[0].mxu0
          %1008 = vmatprep.mubr.bf16.mxu0 0
          %1009 = vmatmul.mubr.bf16.gmra.mrb[0].mxu0 %v862
          %v1010 = vpop.f32.mrb[0].mxu0
          %v1011 = vadd.f32 0.0, %v1010
          %v1012 = vpop.f32.mrb[0].mxu0
          %v1013 = vpop.f32.mrb[0].mxu0
          %v1014 = vadd.f32 0.0, %v1013
          %v1015 = vpop.f32.mrb[0].mxu0
          %1016 = vmatprep.mubr.bf16.mxu0 0
          %1017 = vmatmul.mubr.bf16.gmra.mrb[0].mxu0 %v863
          %v1018 = vpop.f32.mrb[0].mxu0
          %v1019 = vadd.f32 0.0, %v1018
          %v1020 = vpop.f32.mrb[0].mxu0
          %v1021 = vpop.f32.mrb[0].mxu0
          %v1022 = vadd.f32 0.0, %v1021
          %v1023 = vpop.f32.mrb[0].mxu0
          %1024 = vdwg.mxu0
          %v1025 = vpack.c.bf16 %v966, %v963
          %v1026 = vpack.c.bf16 %v974, %v971
          %v1027 = vpack.c.bf16 %v982, %v979
          %v1028 = vpack.c.bf16 %v990, %v987
          %v1029 = vpack.c.bf16 %v998, %v995
          %v1030 = vpack.c.bf16 %v1006, %v1003
          %v1031 = vpack.c.bf16 %v1014, %v1011
          %v1032 = vpack.c.bf16 %v1022, %v1019
          %v1041 = vunpack.c.l.b16 %v1025
          %v1042 = vunpack.c.h.b16 %v1025
          %v1043 = vunpack.c.l.b16 %v1026
          %v1044 = vunpack.c.h.b16 %v1026
          %v1045 = vunpack.c.l.b16 %v1027
          %v1046 = vunpack.c.h.b16 %v1027
          %v1047 = vunpack.c.l.b16 %v1028
          %v1048 = vunpack.c.h.b16 %v1028
          %v1049 = vunpack.c.l.b16 %v1029
          %v1050 = vunpack.c.h.b16 %v1029
          %v1051 = vunpack.c.l.b16 %v1030
          %v1052 = vunpack.c.h.b16 %v1030
          %v1053 = vunpack.c.l.b16 %v1031
          %v1054 = vunpack.c.h.b16 %v1031
          %v1055 = vunpack.c.l.b16 %v1032
          %v1056 = vunpack.c.h.b16 %v1032
          %v1057 = vpack.c.b16 %v1041, %v1041
          %v1058 = vpack.c.b16 %v1042, %v1042
          %v1059 = vpack.c.b16 %v1043, %v1043
          %v1060 = vpack.c.b16 %v1044, %v1044
          %v1061 = vpack.c.b16 %v1045, %v1045
          %v1062 = vpack.c.b16 %v1046, %v1046
          %v1063 = vpack.c.b16 %v1047, %v1047
          %v1064 = vpack.c.b16 %v1048, %v1048
          %v1065 = vpack.c.b16 %v1049, %v1049
          %v1066 = vpack.c.b16 %v1050, %v1050
          %v1067 = vpack.c.b16 %v1051, %v1051
          %v1068 = vpack.c.b16 %v1052, %v1052
          %v1069 = vpack.c.b16 %v1053, %v1053
          %v1070 = vpack.c.b16 %v1054, %v1054
          %v1071 = vpack.c.b16 %v1055, %v1055
          %v1072 = vpack.c.b16 %v1056, %v1056
          %1089 = vst [vmem:[%s343] sm:$0xf] %v1057
          %1090 = vst [vmem:[%s343 + $0x4] sm:$0xf] %v1058
          %1091 = vst [vmem:[%s343 + $0x8] sm:$0xf] %v1059
          %1092 = vst [vmem:[%s343 + $0xc] sm:$0xf] %v1060
          %1093 = vst [vmem:[%s343 + $0x10] sm:$0xf] %v1061
          %1094 = vst [vmem:[%s343 + $0x14] sm:$0xf] %v1062
          %1095 = vst [vmem:[%s343 + $0x18] sm:$0xf] %v1063
          %1096 = vst [vmem:[%s343 + $0x1c] sm:$0xf] %v1064
          %1097 = vst [vmem:[%s343 + $0x20] sm:$0xf] %v1065
          %1098 = vst [vmem:[%s343 + $0x24] sm:$0xf] %v1066
          %1099 = vst [vmem:[%s343 + $0x28] sm:$0xf] %v1067
          %1100 = vst [vmem:[%s343 + $0x2c] sm:$0xf] %v1068
          %1101 = vst [vmem:[%s343 + $0x30] sm:$0xf] %v1069
          %1102 = vst [vmem:[%s343 + $0x34] sm:$0xf] %v1070
          %1103 = vst [vmem:[%s343 + $0x38] sm:$0xf] %v1071
          %1104 = vst [vmem:[%s343 + $0x3c] sm:$0xf] %v1072
        $region89: #{gcn_forward.2} parent=76 // pred_fallthru
          _
        %s1105 = smul.u32 16, %s20
        %p1106 = scmp.lt.s32.totalorder %s1105, 31
        %s1107 = scalar_select %p1106, %s1105, 31
        %s1108 = smul.addr %s1107, 4
        %s1109 = scalar_lea.vmem %s5, %s1108
        // Predicated region
        $region90: #{gcn_forward.2} parent=76 // pred_check
          %p1110 = pneg %p158
        $region91: #{gcn_forward.2} parent=76 // pred_check_branch
          %1112 = sbr.rel (%p1110) target = $region93
        $region92: #{gcn_forward.2} parent=76 // pred_region
          %s1113 = smul.u32 16, %s20
        $region93: #{gcn_forward.2} parent=76 // pred_fallthru
          _
      $region77: #{gcn_forward.2} parent=5 // pred_fallthru
        _
      %p1114 = scmp.le.s32.totalorder 2, %s11
      // Predicated region
      $region94: #{gcn_forward.2} parent=5 // pred_check
        %p1115 = pneg %p1114
      $region95: #{gcn_forward.2} parent=5 // pred_check_branch
        %1117 = sbr.rel (%p1115) target = $region97
      $region96: #{gcn_forward.2} parent=5 // pred_region
        %s1118 = ssub.s32 %s11, 2
        // Predicated region
        $region98: #{gcn_forward.2} parent=96 // pred_check
          %p1119 = pneg %p164
        $region99: #{gcn_forward.2} parent=96 // pred_check_branch
          %1121 = sbr.rel (%p1119) target = $region101
        $region100: #{gcn_forward.2} parent=96 // pred_region
          %s1122 = smul.u32 16, %s22
          %p1123 = scmp.lt.s32.totalorder %s1122, 31
          %s1124 = scalar_select %p1123, %s1122, 31
          %s1125 = smul.addr %s1124, 4
          %s1126 = scalar_lea.vmem %s5, %s1125
        $region101: #{gcn_forward.2} parent=96 // pred_fallthru
          _
      $region97: #{gcn_forward.2} parent=5 // pred_fallthru
        _
    $region6: #{gcn_forward.2} parent=1 // loop_footer
      %s15 = sadd.s32 1, %s11
    $region7: #{gcn_forward.2} parent=1 // loop_footer_branch
      %10 = sbr.rel target = $region3
    $region8: #{gcn_forward.2} parent=1 // loop_exit
      _

</llo_original>
